<compile_context>
chip_gen: v6e
topology: v6e:2x2x1
jax: 0.10.0
libtpu: 0.0.40
codegen_flags: <defaults>
</compile_context>

<pallas_src>
import functools
import math

import jax
import jax.numpy as jnp
from jax.experimental import pallas as pl
from jax.experimental.pallas import tpu as pltpu

# ----------------------------- config ---------------------------------------
D_MODEL = 32
N_HEAD = 4
DIM_FF = 64
BATCH = 2
SEQ = 8
HEAD_DIM = D_MODEL // N_HEAD


# ----------------------------- kernel ---------------------------------------
def encoder_layer_kernel(
    x_ref,       # (B*S, D)
    wqkv_ref,    # (D, 3D)   [wq*scale | wk | wv]
    bqkv_ref,    # (1, 3D)   [bq*scale | bk | bv]
    wof_ref,     # (D, F)    wo @ wf   (exact fusion: no nonlinearity between)
    bof_ref,     # (1, F)    bo @ wf + bf
    o_ref,       # (B*S, F)
    *,
    batch,
    seq,
    n_head,
    head_dim,
):
    d_model = n_head * head_dim
    x = x_ref[...]                                              # (B*S, D)

    # --- fused QKV projection: one MXU push with M = B*S rows + one bias add ---
    qkv = (
        jnp.dot(x, wqkv_ref[...], preferred_element_type=jnp.float32)
        + bqkv_ref[...]
    )                                                           # (B*S, 3D)

    # (B*S, 3D) -> (B, S, 3D): tile-aligned split of the sublane axis (S == 8),
    # a free shape-cast (no data movement).
    qkv3 = qkv.reshape(batch, seq, 3 * d_model)

    # Gather heads onto a leading "group" axis g = h*B + b using lane slices and
    # a leading-axis concatenate only (no transposes, no per-head matmul loop).
    def split_heads(col0):
        return jnp.concatenate(
            [
                qkv3[:, :, col0 + h * head_dim : col0 + (h + 1) * head_dim]
                for h in range(n_head)
            ],
            axis=0,
        )                                                       # (H*B, S, Dh)

    qh = split_heads(0)             # scale already folded into wq/bq
    kh = split_heads(d_model)
    vh = split_heads(2 * d_model)

    # --- batched scaled-dot-product attention over all (head, batch) groups ---
    s = jnp.einsum("gqd,gkd->gqk", qh, kh,
                   preferred_element_type=jnp.float32)          # (H*B, S, S)
    m = jnp.max(s, axis=-1, keepdims=True)
    e = jnp.exp(s - m)
    denom = jnp.sum(e, axis=-1, keepdims=True)
    # Exact fp32 reciprocal: the approximate (EUP) path is bf16-quality under
    # the non-Mosaic lowering and broke the 1e-4-level reference check.
    p = e * (1.0 / denom)
    ctx = jnp.einsum("gqk,gkd->gqd", p, vh,
                     preferred_element_type=jnp.float32)        # (H*B, S, Dh)

    # Merge heads back: one 4-way lane concat, then a free shape-cast to 2D.
    attn = jnp.concatenate(
        [ctx[h * batch : (h + 1) * batch] for h in range(n_head)], axis=-1
    )                                                           # (B, S, D)
    attn2 = attn.reshape(batch * seq, d_model)                  # (B*S, D)

    # --- fused (output projection @ feed-forward) matmul + bias + ReLU ---
    ff = (
        jnp.dot(attn2, wof_ref[...], preferred_element_type=jnp.float32)
        + bof_ref[...]
    )                                                           # (B*S, F)
    o_ref[...] = jnp.maximum(ff, 0.0)


# ----------------------------- parameter folding -----------------------------
def fold_params(params):
    """One-time (init-time) parameter folding; not per-call work."""
    scale = 1.0 / math.sqrt(HEAD_DIM)
    wqkv = jnp.concatenate(
        [params["wq"] * scale, params["wk"], params["wv"]], axis=1
    )                                                           # (D, 3D)
    bqkv = jnp.concatenate(
        [params["bq"] * scale, params["bk"], params["bv"]], axis=1
    )                                                           # (1, 3D)
    wof = params["wo"] @ params["wf"]                           # (D, F)
    bof = params["bo"] @ params["wf"] + params["bf"]            # (1, F)
    return {"wqkv": wqkv, "bqkv": bqkv, "wof": wof, "bof": bof}


# ----------------------------- wrapper ---------------------------------------
def transformer_encoder_layer(x, folded):
    """x: (B, S, D_MODEL) float32 -> (B, S, DIM_FF) float32 (batch-first)."""
    B, S, D = x.shape
    Fdim = folded["wof"].shape[1]

    # Whole batch in a single kernel step: flatten to (B*S, D) rows.
    x2 = x.reshape(B * S, D)

    # Grid-less call: every operand is tiny (< 30 KiB total) and lives fully in
    # VMEM; no tiling / pipelining needed on any TPU generation.
    in_specs = [
        pl.BlockSpec(memory_space=pltpu.MemorySpace.VMEM) for _ in range(5)
    ]
    out_spec = pl.BlockSpec(memory_space=pltpu.MemorySpace.VMEM)

    out2 = pl.pallas_call(
        functools.partial(
            encoder_layer_kernel,
            batch=B, seq=S, n_head=N_HEAD, head_dim=HEAD_DIM,
        ),
        out_shape=jax.ShapeDtypeStruct((B * S, Fdim), jnp.float32),
        in_specs=in_specs,
        out_specs=out_spec,
    )(x2, folded["wqkv"], folded["bqkv"], folded["wof"], folded["bof"])

    return out2.reshape(B, S, Fdim)


# ----------------------------- reference (plain JAX, unfused) ----------------
def reference(x, params):
    q = x @ params["wq"] + params["bq"]
    k = x @ params["wk"] + params["bk"]
    v = x @ params["wv"] + params["bv"]
    B, S, D = x.shape
    qh = q.reshape(B, S, N_HEAD, HEAD_DIM).transpose(0, 2, 1, 3)
    kh = k.reshape(B, S, N_HEAD, HEAD_DIM).transpose(0, 2, 1, 3)
    vh = v.reshape(B, S, N_HEAD, HEAD_DIM).transpose(0, 2, 1, 3)
    s = jnp.einsum("bhqd,bhkd->bhqk", qh, kh) / math.sqrt(HEAD_DIM)
    p = jax.nn.softmax(s, axis=-1)
    a = jnp.einsum("bhqk,bhkd->bhqd", p, vh).transpose(0, 2, 1, 3).reshape(B, S, D)
    a = a @ params["wo"] + params["bo"]
    return jnp.maximum(a @ params["wf"] + params["bf"], 0.0)


# ----------------------------- main ------------------------------------------
if __name__ == "__main__":
    key = jax.random.PRNGKey(0)
    keys = jax.random.split(key, 12)

    def init(k, shape, scale=0.1):
        return (scale * jax.random.normal(k, shape)).astype(jnp.float32)

    params = {
        "wq": init(keys[0], (D_MODEL, D_MODEL)),
        "bq": init(keys[1], (1, D_MODEL)),
        "wk": init(keys[2], (D_MODEL, D_MODEL)),
        "bk": init(keys[3], (1, D_MODEL)),
        "wv": init(keys[4], (D_MODEL, D_MODEL)),
        "bv": init(keys[5], (1, D_MODEL)),
        "wo": init(keys[6], (D_MODEL, D_MODEL)),
        "bo": init(keys[7], (1, D_MODEL)),
        "wf": init(keys[8], (D_MODEL, DIM_FF)),
        "bf": init(keys[9], (1, DIM_FF)),
    }

    x = jax.random.normal(keys[10], (BATCH, SEQ, D_MODEL), dtype=jnp.float32)

    folded = fold_params(params)           # one-time weight folding
    out = transformer_encoder_layer(x, folded)
    out = jax.block_until_ready(out)

    ref = reference(x, params)
    assert out.shape == (BATCH, SEQ, DIM_FF)
    # Exact fp32 softmax in the kernel; remaining deviation vs the unfused
    # reference comes only from fp reassociation in the folded weights (~1e-6).
    assert jnp.allclose(out, ref, atol=1e-4, rtol=1e-4), "mismatch vs reference"

    print("KERNEL_OK")
</pallas_src>

<mosaic_0001>
module attributes {stable_mosaic.version = 11 : i64} {
  func.func @encoder_layer_kernel(%arg0: memref<16x32xf32, #tpu.memory_space<vmem>>, %arg1: memref<32x96xf32, #tpu.memory_space<vmem>>, %arg2: memref<1x96xf32, #tpu.memory_space<vmem>>, %arg3: memref<32x64xf32, #tpu.memory_space<vmem>>, %arg4: memref<1x64xf32, #tpu.memory_space<vmem>>, %arg5: memref<16x64xf32, #tpu.memory_space<vmem>>) attributes {dimension_semantics = [], scalar_prefetch = 0 : i64, scratch_operands = 0 : i64, tpu.core_type = #tpu.core_type<tc>} {
    %c0 = arith.constant 0 : index
    %c0_0 = arith.constant 0 : index
    %0 = vector.load %arg0[%c0, %c0_0] : memref<16x32xf32, #tpu.memory_space<vmem>>, vector<16x32xf32>
    %c0_1 = arith.constant 0 : index
    %c0_2 = arith.constant 0 : index
    %1 = vector.load %arg1[%c0_1, %c0_2] : memref<32x96xf32, #tpu.memory_space<vmem>>, vector<32x96xf32>
    %cst = arith.constant dense<0.000000e+00> : vector<16x96xf32>
    %2 = tpu.matmul %0, %1, %cst {dimension_numbers = #tpu.dot_dimension_numbers<[1], [0], [0], [1], [0, 0, 1, 1], [], []>} : vector<16x32xf32>, vector<32x96xf32>, vector<16x96xf32> -> vector<16x96xf32>
    %c0_3 = arith.constant 0 : index
    %c0_4 = arith.constant 0 : index
    %3 = vector.load %arg2[%c0_3, %c0_4] : memref<1x96xf32, #tpu.memory_space<vmem>>, vector<1x96xf32>
    %4 = vector.broadcast %3 : vector<1x96xf32> to vector<16x96xf32>
    %5 = arith.addf %2, %4 : vector<16x96xf32>
    %6 = vector.shape_cast %5 : vector<16x96xf32> to vector<2x8x96xf32>
    %7 = vector.extract_strided_slice %6 {offsets = [0, 0, 0], sizes = [2, 8, 8], strides = [1, 1, 1]} : vector<2x8x96xf32> to vector<2x8x8xf32>
    %8 = vector.extract_strided_slice %6 {offsets = [0, 0, 8], sizes = [2, 8, 8], strides = [1, 1, 1]} : vector<2x8x96xf32> to vector<2x8x8xf32>
    %9 = vector.extract_strided_slice %6 {offsets = [0, 0, 16], sizes = [2, 8, 8], strides = [1, 1, 1]} : vector<2x8x96xf32> to vector<2x8x8xf32>
    %10 = vector.extract_strided_slice %6 {offsets = [0, 0, 24], sizes = [2, 8, 8], strides = [1, 1, 1]} : vector<2x8x96xf32> to vector<2x8x8xf32>
    %11 = tpu.concatenate %7, %8, %9, %10 in 0 : vector<2x8x8xf32>, vector<2x8x8xf32>, vector<2x8x8xf32>, vector<2x8x8xf32> -> vector<8x8x8xf32>
    %12 = vector.extract_strided_slice %6 {offsets = [0, 0, 32], sizes = [2, 8, 8], strides = [1, 1, 1]} : vector<2x8x96xf32> to vector<2x8x8xf32>
    %13 = vector.extract_strided_slice %6 {offsets = [0, 0, 40], sizes = [2, 8, 8], strides = [1, 1, 1]} : vector<2x8x96xf32> to vector<2x8x8xf32>
    %14 = vector.extract_strided_slice %6 {offsets = [0, 0, 48], sizes = [2, 8, 8], strides = [1, 1, 1]} : vector<2x8x96xf32> to vector<2x8x8xf32>
    %15 = vector.extract_strided_slice %6 {offsets = [0, 0, 56], sizes = [2, 8, 8], strides = [1, 1, 1]} : vector<2x8x96xf32> to vector<2x8x8xf32>
    %16 = tpu.concatenate %12, %13, %14, %15 in 0 : vector<2x8x8xf32>, vector<2x8x8xf32>, vector<2x8x8xf32>, vector<2x8x8xf32> -> vector<8x8x8xf32>
    %17 = vector.extract_strided_slice %6 {offsets = [0, 0, 64], sizes = [2, 8, 8], strides = [1, 1, 1]} : vector<2x8x96xf32> to vector<2x8x8xf32>
    %18 = vector.extract_strided_slice %6 {offsets = [0, 0, 72], sizes = [2, 8, 8], strides = [1, 1, 1]} : vector<2x8x96xf32> to vector<2x8x8xf32>
    %19 = vector.extract_strided_slice %6 {offsets = [0, 0, 80], sizes = [2, 8, 8], strides = [1, 1, 1]} : vector<2x8x96xf32> to vector<2x8x8xf32>
    %20 = vector.extract_strided_slice %6 {offsets = [0, 0, 88], sizes = [2, 8, 8], strides = [1, 1, 1]} : vector<2x8x96xf32> to vector<2x8x8xf32>
    %21 = tpu.concatenate %17, %18, %19, %20 in 0 : vector<2x8x8xf32>, vector<2x8x8xf32>, vector<2x8x8xf32>, vector<2x8x8xf32> -> vector<8x8x8xf32>
    "tpu.trace_start"() <{level = 10 : i32, message = "gqd,gkd->gqk"}> : () -> ()
    %cst_5 = arith.constant dense<0.000000e+00> : vector<8x8x8xf32>
    %22 = tpu.matmul %11, %16, %cst_5 {dimension_numbers = #tpu.dot_dimension_numbers<[2], [2], [1], [1], [0, 0, 0, 1, 1, 1], [0], [0]>} : vector<8x8x8xf32>, vector<8x8x8xf32>, vector<8x8x8xf32> -> vector<8x8x8xf32>
    "tpu.trace_stop"() : () -> ()
    %cst_6 = arith.constant dense<0xFF800000> : vector<8x8xf32>
    %23 = vector.multi_reduction <maximumf>, %22, %cst_6 [2] : vector<8x8x8xf32> to vector<8x8xf32>
    %24 = vector.shape_cast %23 : vector<8x8xf32> to vector<8x8x1xf32>
    %25 = vector.broadcast %24 : vector<8x8x1xf32> to vector<8x8x8xf32>
    %26 = arith.subf %22, %25 : vector<8x8x8xf32>
    %27 = math.exp %26 : vector<8x8x8xf32>
    %cst_7 = arith.constant dense<0.000000e+00> : vector<8x8xf32>
    %28 = vector.multi_reduction <add>, %27, %cst_7 [2] : vector<8x8x8xf32> to vector<8x8xf32>
    %29 = vector.shape_cast %28 : vector<8x8xf32> to vector<8x8x1xf32>
    %cst_8 = arith.constant 1.000000e+00 : f32
    %30 = vector.broadcast %cst_8 : f32 to vector<8x8x1xf32>
    %31 = arith.divf %30, %29 : vector<8x8x1xf32>
    %32 = vector.broadcast %31 : vector<8x8x1xf32> to vector<8x8x8xf32>
    %33 = arith.mulf %27, %32 : vector<8x8x8xf32>
    "tpu.trace_start"() <{level = 10 : i32, message = "gqk,gkd->gqd"}> : () -> ()
    %cst_9 = arith.constant dense<0.000000e+00> : vector<8x8x8xf32>
    %34 = tpu.matmul %33, %21, %cst_9 {dimension_numbers = #tpu.dot_dimension_numbers<[2], [1], [1], [2], [0, 0, 0, 1, 1, 2], [0], [0]>} : vector<8x8x8xf32>, vector<8x8x8xf32>, vector<8x8x8xf32> -> vector<8x8x8xf32>
    "tpu.trace_stop"() : () -> ()
    %35 = vector.extract_strided_slice %34 {offsets = [0, 0, 0], sizes = [2, 8, 8], strides = [1, 1, 1]} : vector<8x8x8xf32> to vector<2x8x8xf32>
    %36 = vector.extract_strided_slice %34 {offsets = [2, 0, 0], sizes = [2, 8, 8], strides = [1, 1, 1]} : vector<8x8x8xf32> to vector<2x8x8xf32>
    %37 = vector.extract_strided_slice %34 {offsets = [4, 0, 0], sizes = [2, 8, 8], strides = [1, 1, 1]} : vector<8x8x8xf32> to vector<2x8x8xf32>
    %38 = vector.extract_strided_slice %34 {offsets = [6, 0, 0], sizes = [2, 8, 8], strides = [1, 1, 1]} : vector<8x8x8xf32> to vector<2x8x8xf32>
    %39 = tpu.concatenate %35, %36, %37, %38 in 2 : vector<2x8x8xf32>, vector<2x8x8xf32>, vector<2x8x8xf32>, vector<2x8x8xf32> -> vector<2x8x32xf32>
    %40 = vector.shape_cast %39 : vector<2x8x32xf32> to vector<16x32xf32>
    %c0_10 = arith.constant 0 : index
    %c0_11 = arith.constant 0 : index
    %41 = vector.load %arg3[%c0_10, %c0_11] : memref<32x64xf32, #tpu.memory_space<vmem>>, vector<32x64xf32>
    %cst_12 = arith.constant dense<0.000000e+00> : vector<16x64xf32>
    %42 = tpu.matmul %40, %41, %cst_12 {dimension_numbers = #tpu.dot_dimension_numbers<[1], [0], [0], [1], [0, 0, 1, 1], [], []>} : vector<16x32xf32>, vector<32x64xf32>, vector<16x64xf32> -> vector<16x64xf32>
    %c0_13 = arith.constant 0 : index
    %c0_14 = arith.constant 0 : index
    %43 = vector.load %arg4[%c0_13, %c0_14] : memref<1x64xf32, #tpu.memory_space<vmem>>, vector<1x64xf32>
    %44 = vector.broadcast %43 : vector<1x64xf32> to vector<16x64xf32>
    %45 = arith.addf %42, %44 : vector<16x64xf32>
    %cst_15 = arith.constant 0.000000e+00 : f32
    %46 = vector.broadcast %cst_15 : f32 to vector<16x64xf32>
    %47 = arith.maximumf %45, %46 : vector<16x64xf32>
    %c0_16 = arith.constant 0 : index
    %c0_17 = arith.constant 0 : index
    %48 = vector.load %arg5[%c0_16, %c0_17] : memref<16x64xf32, #tpu.memory_space<vmem>>, vector<16x64xf32>
    tpu.vector_store %arg5[%c0_16, %c0_17], %47 {strides = array<i32>} : memref<16x64xf32, #tpu.memory_space<vmem>>, vector<16x64xf32>,
    return
  }
}

</mosaic_0001>

<llo_original>
// kernel: tpu_custom_call.1
$region0: #{tpu_custom_call.1}
  #allocation0 [shape = 'u32[]', space=smem, size = 0x4, offset = 0x4, fixed_abs, tag = 'smem constant byte address 0x4 - core index']
  #allocation1 [shape = 'u32[144,128]{1,0:T(1,128)}', space=vmem, size = 0x12000, scoped, tag = 'internal scratch']
  %s0 = inlined_call_operand.hbm [shape: f32[16,32], index: 0, kind: input, shape index: {}]
  %s1 = inlined_call_operand.hbm [shape: f32[32,96], index: 1, kind: input, shape index: {}]
  %s2 = inlined_call_operand.vmem [shape: f32[1,96], index: 2, kind: input, shape index: {}]
  %s3 = inlined_call_operand.hbm [shape: f32[32,64], index: 3, kind: input, shape index: {}]
  %s4 = inlined_call_operand.vmem [shape: f32[1,64], index: 4, kind: input, shape index: {}]
  %s5 = inlined_call_operand.hbm [shape: f32[16,64], index: 5, kind: output, shape index: {}]
  %s6 = sld [smem:[#allocation0]]
  $region42: #{tpu_custom_call.1} parent=0
    _
  %s8 = ssub.s32 1, %s6
  %s9 = scalar_select 0, %s8, %s6
  $region1: #{tpu_custom_call.1} parent=0
    #allocation2 [shape = 'u8[8192]{0}', space=vmem, size = 0x2000, scoped, tag = 'input window, operand 0, single buffered']
    #allocation3 [shape = 's32[1]{0}', space=sflag, size = 0x4, scoped, tag = 'scoped memory for tpu_custom_call.1']
    #allocation4 [shape = 's32[1]{0}', space=sflag, size = 0x4, scoped, tag = 'scoped memory for tpu_custom_call.1']
    #allocation5 [shape = 'u8[16384]{0}', space=vmem, size = 0x4000, scoped, tag = 'input window, operand 1, single buffered']
    #allocation6 [shape = 's32[1]{0}', space=sflag, size = 0x4, scoped, tag = 'scoped memory for tpu_custom_call.1']
    #allocation7 [shape = 'u8[16384]{0}', space=vmem, size = 0x4000, scoped, tag = 'input window, operand 3, single buffered']
    #allocation8 [shape = 'u8[8192]{0}', space=vmem, size = 0x2000, scoped, tag = 'output window, operand 0, single buffered']
    %10 = vsyncpa [#allocation3], 0
    %11 = vsyncpa [#allocation6], 0
    %12 = vsyncpa [#allocation4], 0
    // Predicated region
    $region2: #{tpu_custom_call.1} parent=1 // pred_check
      _
    $region3: #{tpu_custom_call.1} parent=1 // pred_check_branch
      %14 = sbr.rel (0) target = $region5
    $region4: #{tpu_custom_call.1} parent=1 // pred_region
      %s16 = ssub.s32 256, 256
      %17 = vsyncadd [#allocation3], %s16
      %s18 = sshll.u32 [#allocation2], 4
      %s19 = int_to_ptr.vmem [resolvable:$true] %s18
      %24 = dma.hbm_to_vmem [thread:$0]  %s0, 256, %s19, [#allocation3], 128, 128, 8
    $region5: #{tpu_custom_call.1} parent=1 // pred_fallthru
      _
    // Predicated region
    $region6: #{tpu_custom_call.1} parent=1 // pred_check
      _
    $region7: #{tpu_custom_call.1} parent=1 // pred_check_branch
      %26 = sbr.rel (0) target = $region9
    $region8: #{tpu_custom_call.1} parent=1 // pred_region
      %s28 = ssub.s32 512, 512
      %29 = vsyncadd [#allocation6], %s28
      %s30 = sshll.u32 [#allocation5], 4
      %s31 = int_to_ptr.vmem [resolvable:$true] %s30
      %36 = dma.hbm_to_vmem [thread:$0]  %s1, 512, %s31, [#allocation6], 128, 128, 8
    $region9: #{tpu_custom_call.1} parent=1 // pred_fallthru
      _
    // Predicated region
    $region10: #{tpu_custom_call.1} parent=1 // pred_check
      _
    $region11: #{tpu_custom_call.1} parent=1 // pred_check_branch
      %38 = sbr.rel (0) target = $region13
    $region12: #{tpu_custom_call.1} parent=1 // pred_region
      _
    $region13: #{tpu_custom_call.1} parent=1 // pred_fallthru
      _
    // Predicated region
    $region14: #{tpu_custom_call.1} parent=1 // pred_check
      _
    $region15: #{tpu_custom_call.1} parent=1 // pred_check_branch
      %40 = sbr.rel (0) target = $region17
    $region16: #{tpu_custom_call.1} parent=1 // pred_region
      %s42 = ssub.s32 512, 512
      %43 = vsyncadd [#allocation6], %s42
      %s44 = sshll.u32 [#allocation7], 4
      %s45 = int_to_ptr.vmem [resolvable:$true] %s44
      %50 = dma.hbm_to_vmem [thread:$0]  %s3, 512, %s45, [#allocation6], 128, 128, 8
    $region17: #{tpu_custom_call.1} parent=1 // pred_fallthru
      _
    // Predicated region
    $region18: #{tpu_custom_call.1} parent=1 // pred_check
      _
    $region19: #{tpu_custom_call.1} parent=1 // pred_check_branch
      %52 = sbr.rel (0) target = $region21
    $region20: #{tpu_custom_call.1} parent=1 // pred_region
      _
    $region21: #{tpu_custom_call.1} parent=1 // pred_fallthru
      _
    // Predicated region
    $region22: #{tpu_custom_call.1} parent=1 // pred_check
      _
    $region23: #{tpu_custom_call.1} parent=1 // pred_check_branch
      %54 = sbr.rel (0) target = $region25
    $region24: #{tpu_custom_call.1} parent=1 // pred_region
      %55 = dma.done [#allocation3], 256
    $region25: #{tpu_custom_call.1} parent=1 // pred_fallthru
      _
    // Predicated region
    $region26: #{tpu_custom_call.1} parent=1 // pred_check
      _
    $region27: #{tpu_custom_call.1} parent=1 // pred_check_branch
      %57 = sbr.rel (0) target = $region29
    $region28: #{tpu_custom_call.1} parent=1 // pred_region
      %58 = dma.done [#allocation6], 512
    $region29: #{tpu_custom_call.1} parent=1 // pred_fallthru
      _
    // Predicated region
    $region30: #{tpu_custom_call.1} parent=1 // pred_check
      _
    $region31: #{tpu_custom_call.1} parent=1 // pred_check_branch
      %60 = sbr.rel (0) target = $region33
    $region32: #{tpu_custom_call.1} parent=1 // pred_region
      %61 = dma.done [#allocation6], 512
    $region33: #{tpu_custom_call.1} parent=1 // pred_fallthru
      _
    %v62 = vld [vmem:[#allocation2] sm:$0xff]
    %v63 = vld [vmem:[#allocation2 + $0x8] sm:$0xff]
    %v64 = vld [vmem:[#allocation5] sm:$0xff]
    %v65 = vld [vmem:[#allocation5 + $0x8] sm:$0xff]
    %v66 = vld [vmem:[#allocation5 + $0x10] sm:$0xff]
    %v67 = vld [vmem:[#allocation5 + $0x18] sm:$0xff]
    %v68 = vld [vmem:[%s2] sm:$0x1]
    %v70 = vlaneseq
    %v71 = vshrl.u32 %v70, 7
    %v72 = vsub.s32 0, %v71
    %v73 = vrot.slane %v68, %v72
    %vm75 = vcmask 261120
    %v77 = vsel %vm75, %v62, 0
    %v80 = vsel %vm75, %v63, 0
    %82 = vmatprep.subr.mxu0 0.0
    %83 = vmatpush1.msra.mxu0 0.0
    %84 = vmatprep.subr.mxu0 0.0
    %85 = vmatpush1.msra.mxu0 0.0
    %86 = vmatprep.subr.mxu0 0.0
    %87 = vmatpush1.msra.mxu0 0.0
    %88 = vmatprep.subr.mxu0 0.0
    %89 = vmatpush1.msra.mxu0 0.0
    %90 = vmatprep.subr.mxu0 0.0
    %91 = vmatpush1.msra.mxu0 0.0
    %92 = vmatprep.subr.mxu0 0.0
    %93 = vmatpush1.msra.mxu0 0.0
    %94 = vmatprep.subr.mxu0 0.0
    %95 = vmatpush1.msra.mxu0 0.0
    %96 = vmatprep.subr.mxu0 0.0
    %97 = vmatpush1.msra.mxu0 0.0
    %98 = vmatprep.subr.mxu0 0.0
    %99 = vmatpush1.msra.mxu0 0.0
    %100 = vmatprep.subr.mxu0 0.0
    %101 = vmatpush1.msra.mxu0 0.0
    %102 = vmatprep.subr.mxu0 0.0
    %103 = vmatpush1.msra.mxu0 0.0
    %104 = vmatprep.subr.mxu0 0.0
    %105 = vmatpush1.msra.mxu0 0.0
    %106 = vmatprep.subr.mxu0 0.0
    %107 = vmatpush1.msra.mxu0 %v67
    %108 = vmatprep.subr.mxu0 0.0
    %109 = vmatpush1.msra.mxu0 %v66
    %110 = vmatprep.subr.mxu0 0.0
    %111 = vmatpush1.msra.mxu0 %v65
    %112 = vmatprep.subr.mxu0 0.0
    %113 = vmatpush1.msra.mxu0 %v64
    %114 = vmatprep.subr.mxu0 0.0
    %115 = vmatpush2.msra.mxu0 0.0
    %116 = vmatprep.subr.mxu0 0.0
    %117 = vmatpush2.msra.mxu0 0.0
    %118 = vmatprep.subr.mxu0 0.0
    %119 = vmatpush2.msra.mxu0 0.0
    %120 = vmatprep.subr.mxu0 0.0
    %121 = vmatpush2.msra.mxu0 0.0
    %122 = vmatprep.subr.mxu0 0.0
    %123 = vmatpush2.msra.mxu0 0.0
    %124 = vmatprep.subr.mxu0 0.0
    %125 = vmatpush2.msra.mxu0 0.0
    %126 = vmatprep.subr.mxu0 0.0
    %127 = vmatpush2.msra.mxu0 0.0
    %128 = vmatprep.subr.mxu0 0.0
    %129 = vmatpush2.msra.mxu0 0.0
    %130 = vmatprep.subr.mxu0 0.0
    %131 = vmatpush2.msra.mxu0 0.0
    %132 = vmatprep.subr.mxu0 0.0
    %133 = vmatpush2.msra.mxu0 0.0
    %134 = vmatprep.subr.mxu0 0.0
    %135 = vmatpush2.msra.mxu0 0.0
    %136 = vmatprep.subr.mxu0 0.0
    %137 = vmatpush2.msra.mxu0 0.0
    %138 = vmatprep.subr.mxu0 0.0
    %139 = vmatpush2.msra.mxu0 0.0
    %140 = vmatprep.subr.mxu0 0.0
    %141 = vmatpush2.msra.mxu0 0.0
    %142 = vmatprep.subr.mxu0 0.0
    %143 = vmatpush2.msra.mxu0 0.0
    %144 = vmatprep.subr.mxu0 0.0
    %145 = vmatpush2.msra.mxu0 0.0
    %146 = vmatprep.mubr.f32.mxu0 0.0
    %147 = vmatmul.mubr.f32.gmra.mxu0 %v77
    %v148 = vpop.f32.mrf.mxu0
    %v149 = vadd.f32 %v73, %v148
    %v150 = vpop.f32.mrf.mxu0
    %151 = vmatprep.mubr.f32.mxu0 0.0
    %152 = vmatmul.mubr.f32.gmra.mxu0 %v80
    %v153 = vpop.f32.mrf.mxu0
    %v154 = vadd.f32 %v73, %v153
    %v155 = vpop.f32.mrf.mxu0
    %156 = vdwg.mxu0
    %159 = vrot.lane.b32.xlu0 %v149, 120
    %v160 = vpop.permute.xlu0 %159
    %161 = vrot.lane.b32.xlu0 %v154, 120
    %v162 = vpop.permute.xlu0 %161
    %163 = vrot.lane.b32.xlu0 %v149, 112
    %v164 = vpop.permute.xlu0 %163
    %165 = vrot.lane.b32.xlu0 %v154, 112
    %v166 = vpop.permute.xlu0 %165
    %167 = vrot.lane.b32.xlu0 %v149, 104
    %v168 = vpop.permute.xlu0 %167
    %169 = vrot.lane.b32.xlu0 %v154, 104
    %v170 = vpop.permute.xlu0 %169
    %171 = vrot.lane.b32.xlu0 %v149, 96
    %v172 = vpop.permute.xlu0 %171
    %vm173 = vcmask 64512
    %v174 = vsel %vm173, %v149, 0
    %v176 = vsel %vm173, %v172, 0
    %178 = vmatprep.subr.mxu0 0.0
    %179 = vmatpush1.xpose.msra.mxu0 0.0
    %180 = vmatprep.subr.mxu0 0.0
    %181 = vmatpush1.xpose.msra.mxu0 0.0
    %182 = vmatprep.subr.mxu0 0.0
    %183 = vmatpush1.xpose.msra.mxu0 0.0
    %184 = vmatprep.subr.mxu0 0.0
    %185 = vmatpush1.xpose.msra.mxu0 0.0
    %186 = vmatprep.subr.mxu0 0.0
    %187 = vmatpush1.xpose.msra.mxu0 0.0
    %188 = vmatprep.subr.mxu0 0.0
    %189 = vmatpush1.xpose.msra.mxu0 0.0
    %190 = vmatprep.subr.mxu0 0.0
    %191 = vmatpush1.xpose.msra.mxu0 0.0
    %192 = vmatprep.subr.mxu0 0.0
    %193 = vmatpush1.xpose.msra.mxu0 0.0
    %194 = vmatprep.subr.mxu0 0.0
    %195 = vmatpush1.xpose.msra.mxu0 0.0
    %196 = vmatprep.subr.mxu0 0.0
    %197 = vmatpush1.xpose.msra.mxu0 0.0
    %198 = vmatprep.subr.mxu0 0.0
    %199 = vmatpush1.xpose.msra.mxu0 0.0
    %200 = vmatprep.subr.mxu0 0.0
    %201 = vmatpush1.xpose.msra.mxu0 0.0
    %202 = vmatprep.subr.mxu0 0.0
    %203 = vmatpush1.xpose.msra.mxu0 0.0
    %204 = vmatprep.subr.mxu0 0.0
    %205 = vmatpush1.xpose.msra.mxu0 0.0
    %206 = vmatprep.subr.mxu0 0.0
    %207 = vmatpush1.xpose.msra.mxu0 0.0
    %208 = vmatprep.subr.mxu0 0.0
    %209 = vmatpush1.xpose.msra.mxu0 %v176
    %210 = vmatprep.subr.mxu0 0.0
    %211 = vmatpush2.xpose.msra.mxu0 0.0
    %212 = vmatprep.subr.mxu0 0.0
    %213 = vmatpush2.xpose.msra.mxu0 0.0
    %214 = vmatprep.subr.mxu0 0.0
    %215 = vmatpush2.xpose.msra.mxu0 0.0
    %216 = vmatprep.subr.mxu0 0.0
    %217 = vmatpush2.xpose.msra.mxu0 0.0
    %218 = vmatprep.subr.mxu0 0.0
    %219 = vmatpush2.xpose.msra.mxu0 0.0
    %220 = vmatprep.subr.mxu0 0.0
    %221 = vmatpush2.xpose.msra.mxu0 0.0
    %222 = vmatprep.subr.mxu0 0.0
    %223 = vmatpush2.xpose.msra.mxu0 0.0
    %224 = vmatprep.subr.mxu0 0.0
    %225 = vmatpush2.xpose.msra.mxu0 0.0
    %226 = vmatprep.subr.mxu0 0.0
    %227 = vmatpush2.xpose.msra.mxu0 0.0
    %228 = vmatprep.subr.mxu0 0.0
    %229 = vmatpush2.xpose.msra.mxu0 0.0
    %230 = vmatprep.subr.mxu0 0.0
    %231 = vmatpush2.xpose.msra.mxu0 0.0
    %232 = vmatprep.subr.mxu0 0.0
    %233 = vmatpush2.xpose.msra.mxu0 0.0
    %234 = vmatprep.subr.mxu0 0.0
    %235 = vmatpush2.xpose.msra.mxu0 0.0
    %236 = vmatprep.subr.mxu0 0.0
    %237 = vmatpush2.xpose.msra.mxu0 0.0
    %238 = vmatprep.subr.mxu0 0.0
    %239 = vmatpush2.xpose.msra.mxu0 0.0
    %240 = vmatprep.subr.mxu0 0.0
    %241 = vmatpush2.xpose.msra.mxu0 0.0
    %242 = vmatprep.mubr.f32.mxu0 0.0
    %243 = vmatmul.mubr.f32.gmra.mxu0 %v174
    %v244 = vpop.f32.mrf.mxu0
    %v245 = vadd.f32 0.0, %v244
    %v246 = vpop.f32.mrf.mxu0
    %247 = vdwg.mxu0
    %248 = vrot.lane.b32.xlu0 %v154, 96
    %v249 = vpop.permute.xlu0 %248
    %v250 = vsel %vm173, %v154, 0
    %v252 = vsel %vm173, %v249, 0
    %254 = vmatprep.subr.mxu0 0.0
    %255 = vmatpush1.xpose.msra.mxu0 0.0
    %256 = vmatprep.subr.mxu0 0.0
    %257 = vmatpush1.xpose.msra.mxu0 0.0
    %258 = vmatprep.subr.mxu0 0.0
    %259 = vmatpush1.xpose.msra.mxu0 0.0
    %260 = vmatprep.subr.mxu0 0.0
    %261 = vmatpush1.xpose.msra.mxu0 0.0
    %262 = vmatprep.subr.mxu0 0.0
    %263 = vmatpush1.xpose.msra.mxu0 0.0
    %264 = vmatprep.subr.mxu0 0.0
    %265 = vmatpush1.xpose.msra.mxu0 0.0
    %266 = vmatprep.subr.mxu0 0.0
    %267 = vmatpush1.xpose.msra.mxu0 0.0
    %268 = vmatprep.subr.mxu0 0.0
    %269 = vmatpush1.xpose.msra.mxu0 0.0
    %270 = vmatprep.subr.mxu0 0.0
    %271 = vmatpush1.xpose.msra.mxu0 0.0
    %272 = vmatprep.subr.mxu0 0.0
    %273 = vmatpush1.xpose.msra.mxu0 0.0
    %274 = vmatprep.subr.mxu0 0.0
    %275 = vmatpush1.xpose.msra.mxu0 0.0
    %276 = vmatprep.subr.mxu0 0.0
    %277 = vmatpush1.xpose.msra.mxu0 0.0
    %278 = vmatprep.subr.mxu0 0.0
    %279 = vmatpush1.xpose.msra.mxu0 0.0
    %280 = vmatprep.subr.mxu0 0.0
    %281 = vmatpush1.xpose.msra.mxu0 0.0
    %282 = vmatprep.subr.mxu0 0.0
    %283 = vmatpush1.xpose.msra.mxu0 0.0
    %284 = vmatprep.subr.mxu0 0.0
    %285 = vmatpush1.xpose.msra.mxu0 %v252
    %286 = vmatprep.subr.mxu0 0.0
    %287 = vmatpush2.xpose.msra.mxu0 0.0
    %288 = vmatprep.subr.mxu0 0.0
    %289 = vmatpush2.xpose.msra.mxu0 0.0
    %290 = vmatprep.subr.mxu0 0.0
    %291 = vmatpush2.xpose.msra.mxu0 0.0
    %292 = vmatprep.subr.mxu0 0.0
    %293 = vmatpush2.xpose.msra.mxu0 0.0
    %294 = vmatprep.subr.mxu0 0.0
    %295 = vmatpush2.xpose.msra.mxu0 0.0
    %296 = vmatprep.subr.mxu0 0.0
    %297 = vmatpush2.xpose.msra.mxu0 0.0
    %298 = vmatprep.subr.mxu0 0.0
    %299 = vmatpush2.xpose.msra.mxu0 0.0
    %300 = vmatprep.subr.mxu0 0.0
    %301 = vmatpush2.xpose.msra.mxu0 0.0
    %302 = vmatprep.subr.mxu0 0.0
    %303 = vmatpush2.xpose.msra.mxu0 0.0
    %304 = vmatprep.subr.mxu0 0.0
    %305 = vmatpush2.xpose.msra.mxu0 0.0
    %306 = vmatprep.subr.mxu0 0.0
    %307 = vmatpush2.xpose.msra.mxu0 0.0
    %308 = vmatprep.subr.mxu0 0.0
    %309 = vmatpush2.xpose.msra.mxu0 0.0
    %310 = vmatprep.subr.mxu0 0.0
    %311 = vmatpush2.xpose.msra.mxu0 0.0
    %312 = vmatprep.subr.mxu0 0.0
    %313 = vmatpush2.xpose.msra.mxu0 0.0
    %314 = vmatprep.subr.mxu0 0.0
    %315 = vmatpush2.xpose.msra.mxu0 0.0
    %316 = vmatprep.subr.mxu0 0.0
    %317 = vmatpush2.xpose.msra.mxu0 0.0
    %318 = vmatprep.mubr.f32.mxu0 0.0
    %319 = vmatmul.mubr.f32.gmra.mxu0 %v250
    %v320 = vpop.f32.mrf.mxu0
    %v321 = vadd.f32 0.0, %v320
    %v322 = vpop.f32.mrf.mxu0
    %323 = vdwg.mxu0
    %324 = vrot.lane.b32.xlu0 %v160, 96
    %v325 = vpop.permute.xlu0 %324
    %v326 = vsel %vm173, %v160, 0
    %v328 = vsel %vm173, %v325, 0
    %330 = vmatprep.subr.mxu0 0.0
    %331 = vmatpush1.xpose.msra.mxu0 0.0
    %332 = vmatprep.subr.mxu0 0.0
    %333 = vmatpush1.xpose.msra.mxu0 0.0
    %334 = vmatprep.subr.mxu0 0.0
    %335 = vmatpush1.xpose.msra.mxu0 0.0
    %336 = vmatprep.subr.mxu0 0.0
    %337 = vmatpush1.xpose.msra.mxu0 0.0
    %338 = vmatprep.subr.mxu0 0.0
    %339 = vmatpush1.xpose.msra.mxu0 0.0
    %340 = vmatprep.subr.mxu0 0.0
    %341 = vmatpush1.xpose.msra.mxu0 0.0
    %342 = vmatprep.subr.mxu0 0.0
    %343 = vmatpush1.xpose.msra.mxu0 0.0
    %344 = vmatprep.subr.mxu0 0.0
    %345 = vmatpush1.xpose.msra.mxu0 0.0
    %346 = vmatprep.subr.mxu0 0.0
    %347 = vmatpush1.xpose.msra.mxu0 0.0
    %348 = vmatprep.subr.mxu0 0.0
    %349 = vmatpush1.xpose.msra.mxu0 0.0
    %350 = vmatprep.subr.mxu0 0.0
    %351 = vmatpush1.xpose.msra.mxu0 0.0
    %352 = vmatprep.subr.mxu0 0.0
    %353 = vmatpush1.xpose.msra.mxu0 0.0
    %354 = vmatprep.subr.mxu0 0.0
    %355 = vmatpush1.xpose.msra.mxu0 0.0
    %356 = vmatprep.subr.mxu0 0.0
    %357 = vmatpush1.xpose.msra.mxu0 0.0
    %358 = vmatprep.subr.mxu0 0.0
    %359 = vmatpush1.xpose.msra.mxu0 0.0
    %360 = vmatprep.subr.mxu0 0.0
    %361 = vmatpush1.xpose.msra.mxu0 %v328
    %362 = vmatprep.subr.mxu0 0.0
    %363 = vmatpush2.xpose.msra.mxu0 0.0
    %364 = vmatprep.subr.mxu0 0.0
    %365 = vmatpush2.xpose.msra.mxu0 0.0
    %366 = vmatprep.subr.mxu0 0.0
    %367 = vmatpush2.xpose.msra.mxu0 0.0
    %368 = vmatprep.subr.mxu0 0.0
    %369 = vmatpush2.xpose.msra.mxu0 0.0
    %370 = vmatprep.subr.mxu0 0.0
    %371 = vmatpush2.xpose.msra.mxu0 0.0
    %372 = vmatprep.subr.mxu0 0.0
    %373 = vmatpush2.xpose.msra.mxu0 0.0
    %374 = vmatprep.subr.mxu0 0.0
    %375 = vmatpush2.xpose.msra.mxu0 0.0
    %376 = vmatprep.subr.mxu0 0.0
    %377 = vmatpush2.xpose.msra.mxu0 0.0
    %378 = vmatprep.subr.mxu0 0.0
    %379 = vmatpush2.xpose.msra.mxu0 0.0
    %380 = vmatprep.subr.mxu0 0.0
    %381 = vmatpush2.xpose.msra.mxu0 0.0
    %382 = vmatprep.subr.mxu0 0.0
    %383 = vmatpush2.xpose.msra.mxu0 0.0
    %384 = vmatprep.subr.mxu0 0.0
    %385 = vmatpush2.xpose.msra.mxu0 0.0
    %386 = vmatprep.subr.mxu0 0.0
    %387 = vmatpush2.xpose.msra.mxu0 0.0
    %388 = vmatprep.subr.mxu0 0.0
    %389 = vmatpush2.xpose.msra.mxu0 0.0
    %390 = vmatprep.subr.mxu0 0.0
    %391 = vmatpush2.xpose.msra.mxu0 0.0
    %392 = vmatprep.subr.mxu0 0.0
    %393 = vmatpush2.xpose.msra.mxu0 0.0
    %394 = vmatprep.mubr.f32.mxu0 0.0
    %395 = vmatmul.mubr.f32.gmra.mxu0 %v326
    %v396 = vpop.f32.mrf.mxu0
    %v397 = vadd.f32 0.0, %v396
    %v398 = vpop.f32.mrf.mxu0
    %399 = vdwg.mxu0
    %400 = vrot.lane.b32.xlu0 %v162, 96
    %v401 = vpop.permute.xlu0 %400
    %v402 = vsel %vm173, %v162, 0
    %v404 = vsel %vm173, %v401, 0
    %406 = vmatprep.subr.mxu0 0.0
    %407 = vmatpush1.xpose.msra.mxu0 0.0
    %408 = vmatprep.subr.mxu0 0.0
    %409 = vmatpush1.xpose.msra.mxu0 0.0
    %410 = vmatprep.subr.mxu0 0.0
    %411 = vmatpush1.xpose.msra.mxu0 0.0
    %412 = vmatprep.subr.mxu0 0.0
    %413 = vmatpush1.xpose.msra.mxu0 0.0
    %414 = vmatprep.subr.mxu0 0.0
    %415 = vmatpush1.xpose.msra.mxu0 0.0
    %416 = vmatprep.subr.mxu0 0.0
    %417 = vmatpush1.xpose.msra.mxu0 0.0
    %418 = vmatprep.subr.mxu0 0.0
    %419 = vmatpush1.xpose.msra.mxu0 0.0
    %420 = vmatprep.subr.mxu0 0.0
    %421 = vmatpush1.xpose.msra.mxu0 0.0
    %422 = vmatprep.subr.mxu0 0.0
    %423 = vmatpush1.xpose.msra.mxu0 0.0
    %424 = vmatprep.subr.mxu0 0.0
    %425 = vmatpush1.xpose.msra.mxu0 0.0
    %426 = vmatprep.subr.mxu0 0.0
    %427 = vmatpush1.xpose.msra.mxu0 0.0
    %428 = vmatprep.subr.mxu0 0.0
    %429 = vmatpush1.xpose.msra.mxu0 0.0
    %430 = vmatprep.subr.mxu0 0.0
    %431 = vmatpush1.xpose.msra.mxu0 0.0
    %432 = vmatprep.subr.mxu0 0.0
    %433 = vmatpush1.xpose.msra.mxu0 0.0
    %434 = vmatprep.subr.mxu0 0.0
    %435 = vmatpush1.xpose.msra.mxu0 0.0
    %436 = vmatprep.subr.mxu0 0.0
    %437 = vmatpush1.xpose.msra.mxu0 %v404
    %438 = vmatprep.subr.mxu0 0.0
    %439 = vmatpush2.xpose.msra.mxu0 0.0
    %440 = vmatprep.subr.mxu0 0.0
    %441 = vmatpush2.xpose.msra.mxu0 0.0
    %442 = vmatprep.subr.mxu0 0.0
    %443 = vmatpush2.xpose.msra.mxu0 0.0
    %444 = vmatprep.subr.mxu0 0.0
    %445 = vmatpush2.xpose.msra.mxu0 0.0
    %446 = vmatprep.subr.mxu0 0.0
    %447 = vmatpush2.xpose.msra.mxu0 0.0
    %448 = vmatprep.subr.mxu0 0.0
    %449 = vmatpush2.xpose.msra.mxu0 0.0
    %450 = vmatprep.subr.mxu0 0.0
    %451 = vmatpush2.xpose.msra.mxu0 0.0
    %452 = vmatprep.subr.mxu0 0.0
    %453 = vmatpush2.xpose.msra.mxu0 0.0
    %454 = vmatprep.subr.mxu0 0.0
    %455 = vmatpush2.xpose.msra.mxu0 0.0
    %456 = vmatprep.subr.mxu0 0.0
    %457 = vmatpush2.xpose.msra.mxu0 0.0
    %458 = vmatprep.subr.mxu0 0.0
    %459 = vmatpush2.xpose.msra.mxu0 0.0
    %460 = vmatprep.subr.mxu0 0.0
    %461 = vmatpush2.xpose.msra.mxu0 0.0
    %462 = vmatprep.subr.mxu0 0.0
    %463 = vmatpush2.xpose.msra.mxu0 0.0
    %464 = vmatprep.subr.mxu0 0.0
    %465 = vmatpush2.xpose.msra.mxu0 0.0
    %466 = vmatprep.subr.mxu0 0.0
    %467 = vmatpush2.xpose.msra.mxu0 0.0
    %468 = vmatprep.subr.mxu0 0.0
    %469 = vmatpush2.xpose.msra.mxu0 0.0
    %470 = vmatprep.mubr.f32.mxu0 0.0
    %471 = vmatmul.mubr.f32.gmra.mxu0 %v402
    %v472 = vpop.f32.mrf.mxu0
    %v473 = vadd.f32 0.0, %v472
    %v474 = vpop.f32.mrf.mxu0
    %475 = vdwg.mxu0
    %476 = vrot.lane.b32.xlu0 %v164, 96
    %v477 = vpop.permute.xlu0 %476
    %v478 = vsel %vm173, %v164, 0
    %v480 = vsel %vm173, %v477, 0
    %482 = vmatprep.subr.mxu0 0.0
    %483 = vmatpush1.xpose.msra.mxu0 0.0
    %484 = vmatprep.subr.mxu0 0.0
    %485 = vmatpush1.xpose.msra.mxu0 0.0
    %486 = vmatprep.subr.mxu0 0.0
    %487 = vmatpush1.xpose.msra.mxu0 0.0
    %488 = vmatprep.subr.mxu0 0.0
    %489 = vmatpush1.xpose.msra.mxu0 0.0
    %490 = vmatprep.subr.mxu0 0.0
    %491 = vmatpush1.xpose.msra.mxu0 0.0
    %492 = vmatprep.subr.mxu0 0.0
    %493 = vmatpush1.xpose.msra.mxu0 0.0
    %494 = vmatprep.subr.mxu0 0.0
    %495 = vmatpush1.xpose.msra.mxu0 0.0
    %496 = vmatprep.subr.mxu0 0.0
    %497 = vmatpush1.xpose.msra.mxu0 0.0
    %498 = vmatprep.subr.mxu0 0.0
    %499 = vmatpush1.xpose.msra.mxu0 0.0
    %500 = vmatprep.subr.mxu0 0.0
    %501 = vmatpush1.xpose.msra.mxu0 0.0
    %502 = vmatprep.subr.mxu0 0.0
    %503 = vmatpush1.xpose.msra.mxu0 0.0
    %504 = vmatprep.subr.mxu0 0.0
    %505 = vmatpush1.xpose.msra.mxu0 0.0
    %506 = vmatprep.subr.mxu0 0.0
    %507 = vmatpush1.xpose.msra.mxu0 0.0
    %508 = vmatprep.subr.mxu0 0.0
    %509 = vmatpush1.xpose.msra.mxu0 0.0
    %510 = vmatprep.subr.mxu0 0.0
    %511 = vmatpush1.xpose.msra.mxu0 0.0
    %512 = vmatprep.subr.mxu0 0.0
    %513 = vmatpush1.xpose.msra.mxu0 %v480
    %514 = vmatprep.subr.mxu0 0.0
    %515 = vmatpush2.xpose.msra.mxu0 0.0
    %516 = vmatprep.subr.mxu0 0.0
    %517 = vmatpush2.xpose.msra.mxu0 0.0
    %518 = vmatprep.subr.mxu0 0.0
    %519 = vmatpush2.xpose.msra.mxu0 0.0
    %520 = vmatprep.subr.mxu0 0.0
    %521 = vmatpush2.xpose.msra.mxu0 0.0
    %522 = vmatprep.subr.mxu0 0.0
    %523 = vmatpush2.xpose.msra.mxu0 0.0
    %524 = vmatprep.subr.mxu0 0.0
    %525 = vmatpush2.xpose.msra.mxu0 0.0
    %526 = vmatprep.subr.mxu0 0.0
    %527 = vmatpush2.xpose.msra.mxu0 0.0
    %528 = vmatprep.subr.mxu0 0.0
    %529 = vmatpush2.xpose.msra.mxu0 0.0
    %530 = vmatprep.subr.mxu0 0.0
    %531 = vmatpush2.xpose.msra.mxu0 0.0
    %532 = vmatprep.subr.mxu0 0.0
    %533 = vmatpush2.xpose.msra.mxu0 0.0
    %534 = vmatprep.subr.mxu0 0.0
    %535 = vmatpush2.xpose.msra.mxu0 0.0
    %536 = vmatprep.subr.mxu0 0.0
    %537 = vmatpush2.xpose.msra.mxu0 0.0
    %538 = vmatprep.subr.mxu0 0.0
    %539 = vmatpush2.xpose.msra.mxu0 0.0
    %540 = vmatprep.subr.mxu0 0.0
    %541 = vmatpush2.xpose.msra.mxu0 0.0
    %542 = vmatprep.subr.mxu0 0.0
    %543 = vmatpush2.xpose.msra.mxu0 0.0
    %544 = vmatprep.subr.mxu0 0.0
    %545 = vmatpush2.xpose.msra.mxu0 0.0
    %546 = vmatprep.mubr.f32.mxu0 0.0
    %547 = vmatmul.mubr.f32.gmra.mxu0 %v478
    %v548 = vpop.f32.mrf.mxu0
    %v549 = vadd.f32 0.0, %v548
    %v550 = vpop.f32.mrf.mxu0
    %551 = vdwg.mxu0
    %552 = vrot.lane.b32.xlu0 %v166, 96
    %v553 = vpop.permute.xlu0 %552
    %v554 = vsel %vm173, %v166, 0
    %v556 = vsel %vm173, %v553, 0
    %558 = vmatprep.subr.mxu0 0.0
    %559 = vmatpush1.xpose.msra.mxu0 0.0
    %560 = vmatprep.subr.mxu0 0.0
    %561 = vmatpush1.xpose.msra.mxu0 0.0
    %562 = vmatprep.subr.mxu0 0.0
    %563 = vmatpush1.xpose.msra.mxu0 0.0
    %564 = vmatprep.subr.mxu0 0.0
    %565 = vmatpush1.xpose.msra.mxu0 0.0
    %566 = vmatprep.subr.mxu0 0.0
    %567 = vmatpush1.xpose.msra.mxu0 0.0
    %568 = vmatprep.subr.mxu0 0.0
    %569 = vmatpush1.xpose.msra.mxu0 0.0
    %570 = vmatprep.subr.mxu0 0.0
    %571 = vmatpush1.xpose.msra.mxu0 0.0
    %572 = vmatprep.subr.mxu0 0.0
    %573 = vmatpush1.xpose.msra.mxu0 0.0
    %574 = vmatprep.subr.mxu0 0.0
    %575 = vmatpush1.xpose.msra.mxu0 0.0
    %576 = vmatprep.subr.mxu0 0.0
    %577 = vmatpush1.xpose.msra.mxu0 0.0
    %578 = vmatprep.subr.mxu0 0.0
    %579 = vmatpush1.xpose.msra.mxu0 0.0
    %580 = vmatprep.subr.mxu0 0.0
    %581 = vmatpush1.xpose.msra.mxu0 0.0
    %582 = vmatprep.subr.mxu0 0.0
    %583 = vmatpush1.xpose.msra.mxu0 0.0
    %584 = vmatprep.subr.mxu0 0.0
    %585 = vmatpush1.xpose.msra.mxu0 0.0
    %586 = vmatprep.subr.mxu0 0.0
    %587 = vmatpush1.xpose.msra.mxu0 0.0
    %588 = vmatprep.subr.mxu0 0.0
    %589 = vmatpush1.xpose.msra.mxu0 %v556
    %590 = vmatprep.subr.mxu0 0.0
    %591 = vmatpush2.xpose.msra.mxu0 0.0
    %592 = vmatprep.subr.mxu0 0.0
    %593 = vmatpush2.xpose.msra.mxu0 0.0
    %594 = vmatprep.subr.mxu0 0.0
    %595 = vmatpush2.xpose.msra.mxu0 0.0
    %596 = vmatprep.subr.mxu0 0.0
    %597 = vmatpush2.xpose.msra.mxu0 0.0
    %598 = vmatprep.subr.mxu0 0.0
    %599 = vmatpush2.xpose.msra.mxu0 0.0
    %600 = vmatprep.subr.mxu0 0.0
    %601 = vmatpush2.xpose.msra.mxu0 0.0
    %602 = vmatprep.subr.mxu0 0.0
    %603 = vmatpush2.xpose.msra.mxu0 0.0
    %604 = vmatprep.subr.mxu0 0.0
    %605 = vmatpush2.xpose.msra.mxu0 0.0
    %606 = vmatprep.subr.mxu0 0.0
    %607 = vmatpush2.xpose.msra.mxu0 0.0
    %608 = vmatprep.subr.mxu0 0.0
    %609 = vmatpush2.xpose.msra.mxu0 0.0
    %610 = vmatprep.subr.mxu0 0.0
    %611 = vmatpush2.xpose.msra.mxu0 0.0
    %612 = vmatprep.subr.mxu0 0.0
    %613 = vmatpush2.xpose.msra.mxu0 0.0
    %614 = vmatprep.subr.mxu0 0.0
    %615 = vmatpush2.xpose.msra.mxu0 0.0
    %616 = vmatprep.subr.mxu0 0.0
    %617 = vmatpush2.xpose.msra.mxu0 0.0
    %618 = vmatprep.subr.mxu0 0.0
    %619 = vmatpush2.xpose.msra.mxu0 0.0
    %620 = vmatprep.subr.mxu0 0.0
    %621 = vmatpush2.xpose.msra.mxu0 0.0
    %622 = vmatprep.mubr.f32.mxu0 0.0
    %623 = vmatmul.mubr.f32.gmra.mxu0 %v554
    %v624 = vpop.f32.mrf.mxu0
    %v625 = vadd.f32 0.0, %v624
    %v626 = vpop.f32.mrf.mxu0
    %627 = vdwg.mxu0
    %628 = vrot.lane.b32.xlu0 %v168, 96
    %v629 = vpop.permute.xlu0 %628
    %v630 = vsel %vm173, %v168, 0
    %v632 = vsel %vm173, %v629, 0
    %634 = vmatprep.subr.mxu0 0.0
    %635 = vmatpush1.xpose.msra.mxu0 0.0
    %636 = vmatprep.subr.mxu0 0.0
    %637 = vmatpush1.xpose.msra.mxu0 0.0
    %638 = vmatprep.subr.mxu0 0.0
    %639 = vmatpush1.xpose.msra.mxu0 0.0
    %640 = vmatprep.subr.mxu0 0.0
    %641 = vmatpush1.xpose.msra.mxu0 0.0
    %642 = vmatprep.subr.mxu0 0.0
    %643 = vmatpush1.xpose.msra.mxu0 0.0
    %644 = vmatprep.subr.mxu0 0.0
    %645 = vmatpush1.xpose.msra.mxu0 0.0
    %646 = vmatprep.subr.mxu0 0.0
    %647 = vmatpush1.xpose.msra.mxu0 0.0
    %648 = vmatprep.subr.mxu0 0.0
    %649 = vmatpush1.xpose.msra.mxu0 0.0
    %650 = vmatprep.subr.mxu0 0.0
    %651 = vmatpush1.xpose.msra.mxu0 0.0
    %652 = vmatprep.subr.mxu0 0.0
    %653 = vmatpush1.xpose.msra.mxu0 0.0
    %654 = vmatprep.subr.mxu0 0.0
    %655 = vmatpush1.xpose.msra.mxu0 0.0
    %656 = vmatprep.subr.mxu0 0.0
    %657 = vmatpush1.xpose.msra.mxu0 0.0
    %658 = vmatprep.subr.mxu0 0.0
    %659 = vmatpush1.xpose.msra.mxu0 0.0
    %660 = vmatprep.subr.mxu0 0.0
    %661 = vmatpush1.xpose.msra.mxu0 0.0
    %662 = vmatprep.subr.mxu0 0.0
    %663 = vmatpush1.xpose.msra.mxu0 0.0
    %664 = vmatprep.subr.mxu0 0.0
    %665 = vmatpush1.xpose.msra.mxu0 %v632
    %666 = vmatprep.subr.mxu0 0.0
    %667 = vmatpush2.xpose.msra.mxu0 0.0
    %668 = vmatprep.subr.mxu0 0.0
    %669 = vmatpush2.xpose.msra.mxu0 0.0
    %670 = vmatprep.subr.mxu0 0.0
    %671 = vmatpush2.xpose.msra.mxu0 0.0
    %672 = vmatprep.subr.mxu0 0.0
    %673 = vmatpush2.xpose.msra.mxu0 0.0
    %674 = vmatprep.subr.mxu0 0.0
    %675 = vmatpush2.xpose.msra.mxu0 0.0
    %676 = vmatprep.subr.mxu0 0.0
    %677 = vmatpush2.xpose.msra.mxu0 0.0
    %678 = vmatprep.subr.mxu0 0.0
    %679 = vmatpush2.xpose.msra.mxu0 0.0
    %680 = vmatprep.subr.mxu0 0.0
    %681 = vmatpush2.xpose.msra.mxu0 0.0
    %682 = vmatprep.subr.mxu0 0.0
    %683 = vmatpush2.xpose.msra.mxu0 0.0
    %684 = vmatprep.subr.mxu0 0.0
    %685 = vmatpush2.xpose.msra.mxu0 0.0
    %686 = vmatprep.subr.mxu0 0.0
    %687 = vmatpush2.xpose.msra.mxu0 0.0
    %688 = vmatprep.subr.mxu0 0.0
    %689 = vmatpush2.xpose.msra.mxu0 0.0
    %690 = vmatprep.subr.mxu0 0.0
    %691 = vmatpush2.xpose.msra.mxu0 0.0
    %692 = vmatprep.subr.mxu0 0.0
    %693 = vmatpush2.xpose.msra.mxu0 0.0
    %694 = vmatprep.subr.mxu0 0.0
    %695 = vmatpush2.xpose.msra.mxu0 0.0
    %696 = vmatprep.subr.mxu0 0.0
    %697 = vmatpush2.xpose.msra.mxu0 0.0
    %698 = vmatprep.mubr.f32.mxu0 0.0
    %699 = vmatmul.mubr.f32.gmra.mxu0 %v630
    %v700 = vpop.f32.mrf.mxu0
    %v701 = vadd.f32 0.0, %v700
    %v702 = vpop.f32.mrf.mxu0
    %703 = vdwg.mxu0
    %704 = vrot.lane.b32.xlu0 %v170, 96
    %v705 = vpop.permute.xlu0 %704
    %v706 = vsel %vm173, %v170, 0
    %v708 = vsel %vm173, %v705, 0
    %710 = vmatprep.subr.mxu0 0.0
    %711 = vmatpush1.xpose.msra.mxu0 0.0
    %712 = vmatprep.subr.mxu0 0.0
    %713 = vmatpush1.xpose.msra.mxu0 0.0
    %714 = vmatprep.subr.mxu0 0.0
    %715 = vmatpush1.xpose.msra.mxu0 0.0
    %716 = vmatprep.subr.mxu0 0.0
    %717 = vmatpush1.xpose.msra.mxu0 0.0
    %718 = vmatprep.subr.mxu0 0.0
    %719 = vmatpush1.xpose.msra.mxu0 0.0
    %720 = vmatprep.subr.mxu0 0.0
    %721 = vmatpush1.xpose.msra.mxu0 0.0
    %722 = vmatprep.subr.mxu0 0.0
    %723 = vmatpush1.xpose.msra.mxu0 0.0
    %724 = vmatprep.subr.mxu0 0.0
    %725 = vmatpush1.xpose.msra.mxu0 0.0
    %726 = vmatprep.subr.mxu0 0.0
    %727 = vmatpush1.xpose.msra.mxu0 0.0
    %728 = vmatprep.subr.mxu0 0.0
    %729 = vmatpush1.xpose.msra.mxu0 0.0
    %730 = vmatprep.subr.mxu0 0.0
    %731 = vmatpush1.xpose.msra.mxu0 0.0
    %732 = vmatprep.subr.mxu0 0.0
    %733 = vmatpush1.xpose.msra.mxu0 0.0
    %734 = vmatprep.subr.mxu0 0.0
    %735 = vmatpush1.xpose.msra.mxu0 0.0
    %736 = vmatprep.subr.mxu0 0.0
    %737 = vmatpush1.xpose.msra.mxu0 0.0
    %738 = vmatprep.subr.mxu0 0.0
    %739 = vmatpush1.xpose.msra.mxu0 0.0
    %740 = vmatprep.subr.mxu0 0.0
    %741 = vmatpush1.xpose.msra.mxu0 %v708
    %742 = vmatprep.subr.mxu0 0.0
    %743 = vmatpush2.xpose.msra.mxu0 0.0
    %744 = vmatprep.subr.mxu0 0.0
    %745 = vmatpush2.xpose.msra.mxu0 0.0
    %746 = vmatprep.subr.mxu0 0.0
    %747 = vmatpush2.xpose.msra.mxu0 0.0
    %748 = vmatprep.subr.mxu0 0.0
    %749 = vmatpush2.xpose.msra.mxu0 0.0
    %750 = vmatprep.subr.mxu0 0.0
    %751 = vmatpush2.xpose.msra.mxu0 0.0
    %752 = vmatprep.subr.mxu0 0.0
    %753 = vmatpush2.xpose.msra.mxu0 0.0
    %754 = vmatprep.subr.mxu0 0.0
    %755 = vmatpush2.xpose.msra.mxu0 0.0
    %756 = vmatprep.subr.mxu0 0.0
    %757 = vmatpush2.xpose.msra.mxu0 0.0
    %758 = vmatprep.subr.mxu0 0.0
    %759 = vmatpush2.xpose.msra.mxu0 0.0
    %760 = vmatprep.subr.mxu0 0.0
    %761 = vmatpush2.xpose.msra.mxu0 0.0
    %762 = vmatprep.subr.mxu0 0.0
    %763 = vmatpush2.xpose.msra.mxu0 0.0
    %764 = vmatprep.subr.mxu0 0.0
    %765 = vmatpush2.xpose.msra.mxu0 0.0
    %766 = vmatprep.subr.mxu0 0.0
    %767 = vmatpush2.xpose.msra.mxu0 0.0
    %768 = vmatprep.subr.mxu0 0.0
    %769 = vmatpush2.xpose.msra.mxu0 0.0
    %770 = vmatprep.subr.mxu0 0.0
    %771 = vmatpush2.xpose.msra.mxu0 0.0
    %772 = vmatprep.subr.mxu0 0.0
    %773 = vmatpush2.xpose.msra.mxu0 0.0
    %774 = vmatprep.mubr.f32.mxu0 0.0
    %775 = vmatmul.mubr.f32.gmra.mxu0 %v706
    %v776 = vpop.f32.mrf.mxu0
    %v777 = vadd.f32 0.0, %v776
    %v778 = vpop.f32.mrf.mxu0
    %779 = vdwg.mxu0
    %v780 = vsel %vm173, %v245, -inf
    %781 = vmax.xlane.f32.xlu0 %v780
    %v782 = vpop.xlane.xlu0 %781
    %v783 = vsel %vm173, %v321, -inf
    %784 = vmax.xlane.f32.xlu0 %v783
    %v785 = vpop.xlane.xlu0 %784
    %v786 = vsel %vm173, %v397, -inf
    %787 = vmax.xlane.f32.xlu0 %v786
    %v788 = vpop.xlane.xlu0 %787
    %v789 = vsel %vm173, %v473, -inf
    %790 = vmax.xlane.f32.xlu0 %v789
    %v791 = vpop.xlane.xlu0 %790
    %v792 = vsel %vm173, %v549, -inf
    %793 = vmax.xlane.f32.xlu0 %v792
    %v794 = vpop.xlane.xlu0 %793
    %v795 = vsel %vm173, %v625, -inf
    %796 = vmax.xlane.f32.xlu0 %v795
    %v797 = vpop.xlane.xlu0 %796
    %v798 = vsel %vm173, %v701, -inf
    %799 = vmax.xlane.f32.xlu0 %v798
    %v800 = vpop.xlane.xlu0 %799
    %v801 = vsel %vm173, %v777, -inf
    %802 = vmax.xlane.f32.xlu0 %v801
    %v803 = vpop.xlane.xlu0 %802
    %v804 = vsub.f32 %v245, %v782
    %v805 = vsub.f32 %v321, %v785
    %v806 = vsub.f32 %v397, %v788
    %v807 = vsub.f32 %v473, %v791
    %v808 = vsub.f32 %v549, %v794
    %v809 = vsub.f32 %v625, %v797
    %v810 = vsub.f32 %v701, %v800
    %v811 = vsub.f32 %v777, %v803
    %v812 = vmul.f32 %v804, 1.442695
    %v813 = vpow.pop %v812
    %v814 = vmul.f32 %v805, 1.442695
    %v815 = vpow.pop %v814
    %v816 = vmul.f32 %v806, 1.442695
    %v817 = vpow.pop %v816
    %v818 = vmul.f32 %v807, 1.442695
    %v819 = vpow.pop %v818
    %v820 = vmul.f32 %v808, 1.442695
    %v821 = vpow.pop %v820
    %v822 = vmul.f32 %v809, 1.442695
    %v823 = vpow.pop %v822
    %v824 = vmul.f32 %v810, 1.442695
    %v825 = vpow.pop %v824
    %v826 = vmul.f32 %v811, 1.442695
    %v827 = vpow.pop %v826
    %v828 = vsel %vm173, %v813, 0.0
    %829 = vadd.xlane.f32.xlu0 %v828
    %v830 = vpop.xlane.xlu0 %829
    %v831 = vsel %vm173, %v815, 0.0
    %832 = vadd.xlane.f32.xlu0 %v831
    %v833 = vpop.xlane.xlu0 %832
    %v834 = vsel %vm173, %v817, 0.0
    %835 = vadd.xlane.f32.xlu0 %v834
    %v836 = vpop.xlane.xlu0 %835
    %v837 = vsel %vm173, %v819, 0.0
    %838 = vadd.xlane.f32.xlu0 %v837
    %v839 = vpop.xlane.xlu0 %838
    %v840 = vsel %vm173, %v821, 0.0
    %841 = vadd.xlane.f32.xlu0 %v840
    %v842 = vpop.xlane.xlu0 %841
    %v843 = vsel %vm173, %v823, 0.0
    %844 = vadd.xlane.f32.xlu0 %v843
    %v845 = vpop.xlane.xlu0 %844
    %v846 = vsel %vm173, %v825, 0.0
    %847 = vadd.xlane.f32.xlu0 %v846
    %v848 = vpop.xlane.xlu0 %847
    %v849 = vsel %vm173, %v827, 0.0
    %850 = vadd.xlane.f32.xlu0 %v849
    %v851 = vpop.xlane.xlu0 %850
    %v852 = vrcp.pop %v830
    %v853 = vmul.f32 1.0, %v852
    %v854 = vrcp.pop %v833
    %v855 = vmul.f32 1.0, %v854
    %v856 = vrcp.pop %v836
    %v857 = vmul.f32 1.0, %v856
    %v858 = vrcp.pop %v839
    %v859 = vmul.f32 1.0, %v858
    %v860 = vrcp.pop %v842
    %v861 = vmul.f32 1.0, %v860
    %v862 = vrcp.pop %v845
    %v863 = vmul.f32 1.0, %v862
    %v864 = vrcp.pop %v848
    %v865 = vmul.f32 1.0, %v864
    %v866 = vrcp.pop %v851
    %v867 = vmul.f32 1.0, %v866
    %v868 = vmul.f32 %v813, %v853
    %v869 = vmul.f32 %v815, %v855
    %v870 = vmul.f32 %v817, %v857
    %v871 = vmul.f32 %v819, %v859
    %v872 = vmul.f32 %v821, %v861
    %v873 = vmul.f32 %v823, %v863
    %v874 = vmul.f32 %v825, %v865
    %v875 = vmul.f32 %v827, %v867
    %876 = vrot.lane.b32.xlu0 %v149, 64
    %v877 = vpop.permute.xlu0 %876
    %v880 = vsel %vm173, %v868, 0
    %882 = vmatprep.subr.mxu0 0.0
    %883 = vmatpush1.msra.mxu0 0.0
    %884 = vmatprep.subr.mxu0 0.0
    %885 = vmatpush1.msra.mxu0 0.0
    %886 = vmatprep.subr.mxu0 0.0
    %887 = vmatpush1.msra.mxu0 0.0
    %888 = vmatprep.subr.mxu0 0.0
    %889 = vmatpush1.msra.mxu0 0.0
    %890 = vmatprep.subr.mxu0 0.0
    %891 = vmatpush1.msra.mxu0 0.0
    %892 = vmatprep.subr.mxu0 0.0
    %893 = vmatpush1.msra.mxu0 0.0
    %894 = vmatprep.subr.mxu0 0.0
    %895 = vmatpush1.msra.mxu0 0.0
    %896 = vmatprep.subr.mxu0 0.0
    %897 = vmatpush1.msra.mxu0 0.0
    %898 = vmatprep.subr.mxu0 0.0
    %899 = vmatpush1.msra.mxu0 0.0
    %900 = vmatprep.subr.mxu0 0.0
    %901 = vmatpush1.msra.mxu0 0.0
    %902 = vmatprep.subr.mxu0 0.0
    %903 = vmatpush1.msra.mxu0 0.0
    %904 = vmatprep.subr.mxu0 0.0
    %905 = vmatpush1.msra.mxu0 0.0
    %906 = vmatprep.subr.mxu0 0.0
    %907 = vmatpush1.msra.mxu0 0.0
    %908 = vmatprep.subr.mxu0 0.0
    %909 = vmatpush1.msra.mxu0 0.0
    %910 = vmatprep.subr.mxu0 0.0
    %911 = vmatpush1.msra.mxu0 0.0
    %912 = vmatprep.subr.mxu0 0.0
    %913 = vmatpush1.msra.mxu0 %v877
    %914 = vmatprep.subr.mxu0 0.0
    %915 = vmatpush2.msra.mxu0 0.0
    %916 = vmatprep.subr.mxu0 0.0
    %917 = vmatpush2.msra.mxu0 0.0
    %918 = vmatprep.subr.mxu0 0.0
    %919 = vmatpush2.msra.mxu0 0.0
    %920 = vmatprep.subr.mxu0 0.0
    %921 = vmatpush2.msra.mxu0 0.0
    %922 = vmatprep.subr.mxu0 0.0
    %923 = vmatpush2.msra.mxu0 0.0
    %924 = vmatprep.subr.mxu0 0.0
    %925 = vmatpush2.msra.mxu0 0.0
    %926 = vmatprep.subr.mxu0 0.0
    %927 = vmatpush2.msra.mxu0 0.0
    %928 = vmatprep.subr.mxu0 0.0
    %929 = vmatpush2.msra.mxu0 0.0
    %930 = vmatprep.subr.mxu0 0.0
    %931 = vmatpush2.msra.mxu0 0.0
    %932 = vmatprep.subr.mxu0 0.0
    %933 = vmatpush2.msra.mxu0 0.0
    %934 = vmatprep.subr.mxu0 0.0
    %935 = vmatpush2.msra.mxu0 0.0
    %936 = vmatprep.subr.mxu0 0.0
    %937 = vmatpush2.msra.mxu0 0.0
    %938 = vmatprep.subr.mxu0 0.0
    %939 = vmatpush2.msra.mxu0 0.0
    %940 = vmatprep.subr.mxu0 0.0
    %941 = vmatpush2.msra.mxu0 0.0
    %942 = vmatprep.subr.mxu0 0.0
    %943 = vmatpush2.msra.mxu0 0.0
    %944 = vmatprep.subr.mxu0 0.0
    %945 = vmatpush2.msra.mxu0 0.0
    %946 = vmatprep.mubr.f32.mxu0 0.0
    %947 = vmatmul.mubr.f32.gmra.mxu0 %v880
    %v948 = vpop.f32.mrf.mxu0
    %v949 = vadd.f32 0.0, %v948
    %v950 = vpop.f32.mrf.mxu0
    %951 = vdwg.mxu0
    %952 = vrot.lane.b32.xlu0 %v154, 64
    %v953 = vpop.permute.xlu0 %952
    %v956 = vsel %vm173, %v869, 0
    %958 = vmatprep.subr.mxu0 0.0
    %959 = vmatpush1.msra.mxu0 0.0
    %960 = vmatprep.subr.mxu0 0.0
    %961 = vmatpush1.msra.mxu0 0.0
    %962 = vmatprep.subr.mxu0 0.0
    %963 = vmatpush1.msra.mxu0 0.0
    %964 = vmatprep.subr.mxu0 0.0
    %965 = vmatpush1.msra.mxu0 0.0
    %966 = vmatprep.subr.mxu0 0.0
    %967 = vmatpush1.msra.mxu0 0.0
    %968 = vmatprep.subr.mxu0 0.0
    %969 = vmatpush1.msra.mxu0 0.0
    %970 = vmatprep.subr.mxu0 0.0
    %971 = vmatpush1.msra.mxu0 0.0
    %972 = vmatprep.subr.mxu0 0.0
    %973 = vmatpush1.msra.mxu0 0.0
    %974 = vmatprep.subr.mxu0 0.0
    %975 = vmatpush1.msra.mxu0 0.0
    %976 = vmatprep.subr.mxu0 0.0
    %977 = vmatpush1.msra.mxu0 0.0
    %978 = vmatprep.subr.mxu0 0.0
    %979 = vmatpush1.msra.mxu0 0.0
    %980 = vmatprep.subr.mxu0 0.0
    %981 = vmatpush1.msra.mxu0 0.0
    %982 = vmatprep.subr.mxu0 0.0
    %983 = vmatpush1.msra.mxu0 0.0
    %984 = vmatprep.subr.mxu0 0.0
    %985 = vmatpush1.msra.mxu0 0.0
    %986 = vmatprep.subr.mxu0 0.0
    %987 = vmatpush1.msra.mxu0 0.0
    %988 = vmatprep.subr.mxu0 0.0
    %989 = vmatpush1.msra.mxu0 %v953
    %990 = vmatprep.subr.mxu0 0.0
    %991 = vmatpush2.msra.mxu0 0.0
    %992 = vmatprep.subr.mxu0 0.0
    %993 = vmatpush2.msra.mxu0 0.0
    %994 = vmatprep.subr.mxu0 0.0
    %995 = vmatpush2.msra.mxu0 0.0
    %996 = vmatprep.subr.mxu0 0.0
    %997 = vmatpush2.msra.mxu0 0.0
    %998 = vmatprep.subr.mxu0 0.0
    %999 = vmatpush2.msra.mxu0 0.0
    %1000 = vmatprep.subr.mxu0 0.0
    %1001 = vmatpush2.msra.mxu0 0.0
    %1002 = vmatprep.subr.mxu0 0.0
    %1003 = vmatpush2.msra.mxu0 0.0
    %1004 = vmatprep.subr.mxu0 0.0
    %1005 = vmatpush2.msra.mxu0 0.0
    %1006 = vmatprep.subr.mxu0 0.0
    %1007 = vmatpush2.msra.mxu0 0.0
    %1008 = vmatprep.subr.mxu0 0.0
    %1009 = vmatpush2.msra.mxu0 0.0
    %1010 = vmatprep.subr.mxu0 0.0
    %1011 = vmatpush2.msra.mxu0 0.0
    %1012 = vmatprep.subr.mxu0 0.0
    %1013 = vmatpush2.msra.mxu0 0.0
    %1014 = vmatprep.subr.mxu0 0.0
    %1015 = vmatpush2.msra.mxu0 0.0
    %1016 = vmatprep.subr.mxu0 0.0
    %1017 = vmatpush2.msra.mxu0 0.0
    %1018 = vmatprep.subr.mxu0 0.0
    %1019 = vmatpush2.msra.mxu0 0.0
    %1020 = vmatprep.subr.mxu0 0.0
    %1021 = vmatpush2.msra.mxu0 0.0
    %1022 = vmatprep.mubr.f32.mxu0 0.0
    %1023 = vmatmul.mubr.f32.gmra.mxu0 %v956
    %v1024 = vpop.f32.mrf.mxu0
    %v1025 = vadd.f32 0.0, %v1024
    %v1026 = vpop.f32.mrf.mxu0
    %1027 = vdwg.mxu0
    %1028 = vrot.lane.b32.xlu0 %v160, 64
    %v1029 = vpop.permute.xlu0 %1028
    %v1032 = vsel %vm173, %v870, 0
    %1034 = vmatprep.subr.mxu0 0.0
    %1035 = vmatpush1.msra.mxu0 0.0
    %1036 = vmatprep.subr.mxu0 0.0
    %1037 = vmatpush1.msra.mxu0 0.0
    %1038 = vmatprep.subr.mxu0 0.0
    %1039 = vmatpush1.msra.mxu0 0.0
    %1040 = vmatprep.subr.mxu0 0.0
    %1041 = vmatpush1.msra.mxu0 0.0
    %1042 = vmatprep.subr.mxu0 0.0
    %1043 = vmatpush1.msra.mxu0 0.0
    %1044 = vmatprep.subr.mxu0 0.0
    %1045 = vmatpush1.msra.mxu0 0.0
    %1046 = vmatprep.subr.mxu0 0.0
    %1047 = vmatpush1.msra.mxu0 0.0
    %1048 = vmatprep.subr.mxu0 0.0
    %1049 = vmatpush1.msra.mxu0 0.0
    %1050 = vmatprep.subr.mxu0 0.0
    %1051 = vmatpush1.msra.mxu0 0.0
    %1052 = vmatprep.subr.mxu0 0.0
    %1053 = vmatpush1.msra.mxu0 0.0
    %1054 = vmatprep.subr.mxu0 0.0
    %1055 = vmatpush1.msra.mxu0 0.0
    %1056 = vmatprep.subr.mxu0 0.0
    %1057 = vmatpush1.msra.mxu0 0.0
    %1058 = vmatprep.subr.mxu0 0.0
    %1059 = vmatpush1.msra.mxu0 0.0
    %1060 = vmatprep.subr.mxu0 0.0
    %1061 = vmatpush1.msra.mxu0 0.0
    %1062 = vmatprep.subr.mxu0 0.0
    %1063 = vmatpush1.msra.mxu0 0.0
    %1064 = vmatprep.subr.mxu0 0.0
    %1065 = vmatpush1.msra.mxu0 %v1029
    %1066 = vmatprep.subr.mxu0 0.0
    %1067 = vmatpush2.msra.mxu0 0.0
    %1068 = vmatprep.subr.mxu0 0.0
    %1069 = vmatpush2.msra.mxu0 0.0
    %1070 = vmatprep.subr.mxu0 0.0
    %1071 = vmatpush2.msra.mxu0 0.0
    %1072 = vmatprep.subr.mxu0 0.0
    %1073 = vmatpush2.msra.mxu0 0.0
    %1074 = vmatprep.subr.mxu0 0.0
    %1075 = vmatpush2.msra.mxu0 0.0
    %1076 = vmatprep.subr.mxu0 0.0
    %1077 = vmatpush2.msra.mxu0 0.0
    %1078 = vmatprep.subr.mxu0 0.0
    %1079 = vmatpush2.msra.mxu0 0.0
    %1080 = vmatprep.subr.mxu0 0.0
    %1081 = vmatpush2.msra.mxu0 0.0
    %1082 = vmatprep.subr.mxu0 0.0
    %1083 = vmatpush2.msra.mxu0 0.0
    %1084 = vmatprep.subr.mxu0 0.0
    %1085 = vmatpush2.msra.mxu0 0.0
    %1086 = vmatprep.subr.mxu0 0.0
    %1087 = vmatpush2.msra.mxu0 0.0
    %1088 = vmatprep.subr.mxu0 0.0
    %1089 = vmatpush2.msra.mxu0 0.0
    %1090 = vmatprep.subr.mxu0 0.0
    %1091 = vmatpush2.msra.mxu0 0.0
    %1092 = vmatprep.subr.mxu0 0.0
    %1093 = vmatpush2.msra.mxu0 0.0
    %1094 = vmatprep.subr.mxu0 0.0
    %1095 = vmatpush2.msra.mxu0 0.0
    %1096 = vmatprep.subr.mxu0 0.0
    %1097 = vmatpush2.msra.mxu0 0.0
    %1098 = vmatprep.mubr.f32.mxu0 0.0
    %1099 = vmatmul.mubr.f32.gmra.mxu0 %v1032
    %v1100 = vpop.f32.mrf.mxu0
    %v1101 = vadd.f32 0.0, %v1100
    %v1102 = vpop.f32.mrf.mxu0
    %1103 = vdwg.mxu0
    %1104 = vrot.lane.b32.xlu0 %v162, 64
    %v1105 = vpop.permute.xlu0 %1104
    %v1108 = vsel %vm173, %v871, 0
    %1110 = vmatprep.subr.mxu0 0.0
    %1111 = vmatpush1.msra.mxu0 0.0
    %1112 = vmatprep.subr.mxu0 0.0
    %1113 = vmatpush1.msra.mxu0 0.0
    %1114 = vmatprep.subr.mxu0 0.0
    %1115 = vmatpush1.msra.mxu0 0.0
    %1116 = vmatprep.subr.mxu0 0.0
    %1117 = vmatpush1.msra.mxu0 0.0
    %1118 = vmatprep.subr.mxu0 0.0
    %1119 = vmatpush1.msra.mxu0 0.0
    %1120 = vmatprep.subr.mxu0 0.0
    %1121 = vmatpush1.msra.mxu0 0.0
    %1122 = vmatprep.subr.mxu0 0.0
    %1123 = vmatpush1.msra.mxu0 0.0
    %1124 = vmatprep.subr.mxu0 0.0
    %1125 = vmatpush1.msra.mxu0 0.0
    %1126 = vmatprep.subr.mxu0 0.0
    %1127 = vmatpush1.msra.mxu0 0.0
    %1128 = vmatprep.subr.mxu0 0.0
    %1129 = vmatpush1.msra.mxu0 0.0
    %1130 = vmatprep.subr.mxu0 0.0
    %1131 = vmatpush1.msra.mxu0 0.0
    %1132 = vmatprep.subr.mxu0 0.0
    %1133 = vmatpush1.msra.mxu0 0.0
    %1134 = vmatprep.subr.mxu0 0.0
    %1135 = vmatpush1.msra.mxu0 0.0
    %1136 = vmatprep.subr.mxu0 0.0
    %1137 = vmatpush1.msra.mxu0 0.0
    %1138 = vmatprep.subr.mxu0 0.0
    %1139 = vmatpush1.msra.mxu0 0.0
    %1140 = vmatprep.subr.mxu0 0.0
    %1141 = vmatpush1.msra.mxu0 %v1105
    %1142 = vmatprep.subr.mxu0 0.0
    %1143 = vmatpush2.msra.mxu0 0.0
    %1144 = vmatprep.subr.mxu0 0.0
    %1145 = vmatpush2.msra.mxu0 0.0
    %1146 = vmatprep.subr.mxu0 0.0
    %1147 = vmatpush2.msra.mxu0 0.0
    %1148 = vmatprep.subr.mxu0 0.0
    %1149 = vmatpush2.msra.mxu0 0.0
    %1150 = vmatprep.subr.mxu0 0.0
    %1151 = vmatpush2.msra.mxu0 0.0
    %1152 = vmatprep.subr.mxu0 0.0
    %1153 = vmatpush2.msra.mxu0 0.0
    %1154 = vmatprep.subr.mxu0 0.0
    %1155 = vmatpush2.msra.mxu0 0.0
    %1156 = vmatprep.subr.mxu0 0.0
    %1157 = vmatpush2.msra.mxu0 0.0
    %1158 = vmatprep.subr.mxu0 0.0
    %1159 = vmatpush2.msra.mxu0 0.0
    %1160 = vmatprep.subr.mxu0 0.0
    %1161 = vmatpush2.msra.mxu0 0.0
    %1162 = vmatprep.subr.mxu0 0.0
    %1163 = vmatpush2.msra.mxu0 0.0
    %1164 = vmatprep.subr.mxu0 0.0
    %1165 = vmatpush2.msra.mxu0 0.0
    %1166 = vmatprep.subr.mxu0 0.0
    %1167 = vmatpush2.msra.mxu0 0.0
    %1168 = vmatprep.subr.mxu0 0.0
    %1169 = vmatpush2.msra.mxu0 0.0
    %1170 = vmatprep.subr.mxu0 0.0
    %1171 = vmatpush2.msra.mxu0 0.0
    %1172 = vmatprep.subr.mxu0 0.0
    %1173 = vmatpush2.msra.mxu0 0.0
    %1174 = vmatprep.mubr.f32.mxu0 0.0
    %1175 = vmatmul.mubr.f32.gmra.mxu0 %v1108
    %v1176 = vpop.f32.mrf.mxu0
    %v1177 = vadd.f32 0.0, %v1176
    %v1178 = vpop.f32.mrf.mxu0
    %1179 = vdwg.mxu0
    %1180 = vrot.lane.b32.xlu0 %v164, 64
    %v1181 = vpop.permute.xlu0 %1180
    %v1184 = vsel %vm173, %v872, 0
    %1186 = vmatprep.subr.mxu0 0.0
    %1187 = vmatpush1.msra.mxu0 0.0
    %1188 = vmatprep.subr.mxu0 0.0
    %1189 = vmatpush1.msra.mxu0 0.0
    %1190 = vmatprep.subr.mxu0 0.0
    %1191 = vmatpush1.msra.mxu0 0.0
    %1192 = vmatprep.subr.mxu0 0.0
    %1193 = vmatpush1.msra.mxu0 0.0
    %1194 = vmatprep.subr.mxu0 0.0
    %1195 = vmatpush1.msra.mxu0 0.0
    %1196 = vmatprep.subr.mxu0 0.0
    %1197 = vmatpush1.msra.mxu0 0.0
    %1198 = vmatprep.subr.mxu0 0.0
    %1199 = vmatpush1.msra.mxu0 0.0
    %1200 = vmatprep.subr.mxu0 0.0
    %1201 = vmatpush1.msra.mxu0 0.0
    %1202 = vmatprep.subr.mxu0 0.0
    %1203 = vmatpush1.msra.mxu0 0.0
    %1204 = vmatprep.subr.mxu0 0.0
    %1205 = vmatpush1.msra.mxu0 0.0
    %1206 = vmatprep.subr.mxu0 0.0
    %1207 = vmatpush1.msra.mxu0 0.0
    %1208 = vmatprep.subr.mxu0 0.0
    %1209 = vmatpush1.msra.mxu0 0.0
    %1210 = vmatprep.subr.mxu0 0.0
    %1211 = vmatpush1.msra.mxu0 0.0
    %1212 = vmatprep.subr.mxu0 0.0
    %1213 = vmatpush1.msra.mxu0 0.0
    %1214 = vmatprep.subr.mxu0 0.0
    %1215 = vmatpush1.msra.mxu0 0.0
    %1216 = vmatprep.subr.mxu0 0.0
    %1217 = vmatpush1.msra.mxu0 %v1181
    %1218 = vmatprep.subr.mxu0 0.0
    %1219 = vmatpush2.msra.mxu0 0.0
    %1220 = vmatprep.subr.mxu0 0.0
    %1221 = vmatpush2.msra.mxu0 0.0
    %1222 = vmatprep.subr.mxu0 0.0
    %1223 = vmatpush2.msra.mxu0 0.0
    %1224 = vmatprep.subr.mxu0 0.0
    %1225 = vmatpush2.msra.mxu0 0.0
    %1226 = vmatprep.subr.mxu0 0.0
    %1227 = vmatpush2.msra.mxu0 0.0
    %1228 = vmatprep.subr.mxu0 0.0
    %1229 = vmatpush2.msra.mxu0 0.0
    %1230 = vmatprep.subr.mxu0 0.0
    %1231 = vmatpush2.msra.mxu0 0.0
    %1232 = vmatprep.subr.mxu0 0.0
    %1233 = vmatpush2.msra.mxu0 0.0
    %1234 = vmatprep.subr.mxu0 0.0
    %1235 = vmatpush2.msra.mxu0 0.0
    %1236 = vmatprep.subr.mxu0 0.0
    %1237 = vmatpush2.msra.mxu0 0.0
    %1238 = vmatprep.subr.mxu0 0.0
    %1239 = vmatpush2.msra.mxu0 0.0
    %1240 = vmatprep.subr.mxu0 0.0
    %1241 = vmatpush2.msra.mxu0 0.0
    %1242 = vmatprep.subr.mxu0 0.0
    %1243 = vmatpush2.msra.mxu0 0.0
    %1244 = vmatprep.subr.mxu0 0.0
    %1245 = vmatpush2.msra.mxu0 0.0
    %1246 = vmatprep.subr.mxu0 0.0
    %1247 = vmatpush2.msra.mxu0 0.0
    %1248 = vmatprep.subr.mxu0 0.0
    %1249 = vmatpush2.msra.mxu0 0.0
    %1250 = vmatprep.mubr.f32.mxu0 0.0
    %1251 = vmatmul.mubr.f32.gmra.mxu0 %v1184
    %v1252 = vpop.f32.mrf.mxu0
    %v1253 = vadd.f32 0.0, %v1252
    %v1254 = vpop.f32.mrf.mxu0
    %1255 = vdwg.mxu0
    %1256 = vrot.lane.b32.xlu0 %v166, 64
    %v1257 = vpop.permute.xlu0 %1256
    %v1260 = vsel %vm173, %v873, 0
    %1262 = vmatprep.subr.mxu0 0.0
    %1263 = vmatpush1.msra.mxu0 0.0
    %1264 = vmatprep.subr.mxu0 0.0
    %1265 = vmatpush1.msra.mxu0 0.0
    %1266 = vmatprep.subr.mxu0 0.0
    %1267 = vmatpush1.msra.mxu0 0.0
    %1268 = vmatprep.subr.mxu0 0.0
    %1269 = vmatpush1.msra.mxu0 0.0
    %1270 = vmatprep.subr.mxu0 0.0
    %1271 = vmatpush1.msra.mxu0 0.0
    %1272 = vmatprep.subr.mxu0 0.0
    %1273 = vmatpush1.msra.mxu0 0.0
    %1274 = vmatprep.subr.mxu0 0.0
    %1275 = vmatpush1.msra.mxu0 0.0
    %1276 = vmatprep.subr.mxu0 0.0
    %1277 = vmatpush1.msra.mxu0 0.0
    %1278 = vmatprep.subr.mxu0 0.0
    %1279 = vmatpush1.msra.mxu0 0.0
    %1280 = vmatprep.subr.mxu0 0.0
    %1281 = vmatpush1.msra.mxu0 0.0
    %1282 = vmatprep.subr.mxu0 0.0
    %1283 = vmatpush1.msra.mxu0 0.0
    %1284 = vmatprep.subr.mxu0 0.0
    %1285 = vmatpush1.msra.mxu0 0.0
    %1286 = vmatprep.subr.mxu0 0.0
    %1287 = vmatpush1.msra.mxu0 0.0
    %1288 = vmatprep.subr.mxu0 0.0
    %1289 = vmatpush1.msra.mxu0 0.0
    %1290 = vmatprep.subr.mxu0 0.0
    %1291 = vmatpush1.msra.mxu0 0.0
    %1292 = vmatprep.subr.mxu0 0.0
    %1293 = vmatpush1.msra.mxu0 %v1257
    %1294 = vmatprep.subr.mxu0 0.0
    %1295 = vmatpush2.msra.mxu0 0.0
    %1296 = vmatprep.subr.mxu0 0.0
    %1297 = vmatpush2.msra.mxu0 0.0
    %1298 = vmatprep.subr.mxu0 0.0
    %1299 = vmatpush2.msra.mxu0 0.0
    %1300 = vmatprep.subr.mxu0 0.0
    %1301 = vmatpush2.msra.mxu0 0.0
    %1302 = vmatprep.subr.mxu0 0.0
    %1303 = vmatpush2.msra.mxu0 0.0
    %1304 = vmatprep.subr.mxu0 0.0
    %1305 = vmatpush2.msra.mxu0 0.0
    %1306 = vmatprep.subr.mxu0 0.0
    %1307 = vmatpush2.msra.mxu0 0.0
    %1308 = vmatprep.subr.mxu0 0.0
    %1309 = vmatpush2.msra.mxu0 0.0
    %1310 = vmatprep.subr.mxu0 0.0
    %1311 = vmatpush2.msra.mxu0 0.0
    %1312 = vmatprep.subr.mxu0 0.0
    %1313 = vmatpush2.msra.mxu0 0.0
    %1314 = vmatprep.subr.mxu0 0.0
    %1315 = vmatpush2.msra.mxu0 0.0
    %1316 = vmatprep.subr.mxu0 0.0
    %1317 = vmatpush2.msra.mxu0 0.0
    %1318 = vmatprep.subr.mxu0 0.0
    %1319 = vmatpush2.msra.mxu0 0.0
    %1320 = vmatprep.subr.mxu0 0.0
    %1321 = vmatpush2.msra.mxu0 0.0
    %1322 = vmatprep.subr.mxu0 0.0
    %1323 = vmatpush2.msra.mxu0 0.0
    %1324 = vmatprep.subr.mxu0 0.0
    %1325 = vmatpush2.msra.mxu0 0.0
    %1326 = vmatprep.mubr.f32.mxu0 0.0
    %1327 = vmatmul.mubr.f32.gmra.mxu0 %v1260
    %v1328 = vpop.f32.mrf.mxu0
    %v1329 = vadd.f32 0.0, %v1328
    %v1330 = vpop.f32.mrf.mxu0
    %1331 = vdwg.mxu0
    %1332 = vrot.lane.b32.xlu0 %v168, 64
    %v1333 = vpop.permute.xlu0 %1332
    %v1336 = vsel %vm173, %v874, 0
    %1338 = vmatprep.subr.mxu0 0.0
    %1339 = vmatpush1.msra.mxu0 0.0
    %1340 = vmatprep.subr.mxu0 0.0
    %1341 = vmatpush1.msra.mxu0 0.0
    %1342 = vmatprep.subr.mxu0 0.0
    %1343 = vmatpush1.msra.mxu0 0.0
    %1344 = vmatprep.subr.mxu0 0.0
    %1345 = vmatpush1.msra.mxu0 0.0
    %1346 = vmatprep.subr.mxu0 0.0
    %1347 = vmatpush1.msra.mxu0 0.0
    %1348 = vmatprep.subr.mxu0 0.0
    %1349 = vmatpush1.msra.mxu0 0.0
    %1350 = vmatprep.subr.mxu0 0.0
    %1351 = vmatpush1.msra.mxu0 0.0
    %1352 = vmatprep.subr.mxu0 0.0
    %1353 = vmatpush1.msra.mxu0 0.0
    %1354 = vmatprep.subr.mxu0 0.0
    %1355 = vmatpush1.msra.mxu0 0.0
    %1356 = vmatprep.subr.mxu0 0.0
    %1357 = vmatpush1.msra.mxu0 0.0
    %1358 = vmatprep.subr.mxu0 0.0
    %1359 = vmatpush1.msra.mxu0 0.0
    %1360 = vmatprep.subr.mxu0 0.0
    %1361 = vmatpush1.msra.mxu0 0.0
    %1362 = vmatprep.subr.mxu0 0.0
    %1363 = vmatpush1.msra.mxu0 0.0
    %1364 = vmatprep.subr.mxu0 0.0
    %1365 = vmatpush1.msra.mxu0 0.0
    %1366 = vmatprep.subr.mxu0 0.0
    %1367 = vmatpush1.msra.mxu0 0.0
    %1368 = vmatprep.subr.mxu0 0.0
    %1369 = vmatpush1.msra.mxu0 %v1333
    %1370 = vmatprep.subr.mxu0 0.0
    %1371 = vmatpush2.msra.mxu0 0.0
    %1372 = vmatprep.subr.mxu0 0.0
    %1373 = vmatpush2.msra.mxu0 0.0
    %1374 = vmatprep.subr.mxu0 0.0
    %1375 = vmatpush2.msra.mxu0 0.0
    %1376 = vmatprep.subr.mxu0 0.0
    %1377 = vmatpush2.msra.mxu0 0.0
    %1378 = vmatprep.subr.mxu0 0.0
    %1379 = vmatpush2.msra.mxu0 0.0
    %1380 = vmatprep.subr.mxu0 0.0
    %1381 = vmatpush2.msra.mxu0 0.0
    %1382 = vmatprep.subr.mxu0 0.0
    %1383 = vmatpush2.msra.mxu0 0.0
    %1384 = vmatprep.subr.mxu0 0.0
    %1385 = vmatpush2.msra.mxu0 0.0
    %1386 = vmatprep.subr.mxu0 0.0
    %1387 = vmatpush2.msra.mxu0 0.0
    %1388 = vmatprep.subr.mxu0 0.0
    %1389 = vmatpush2.msra.mxu0 0.0
    %1390 = vmatprep.subr.mxu0 0.0
    %1391 = vmatpush2.msra.mxu0 0.0
    %1392 = vmatprep.subr.mxu0 0.0
    %1393 = vmatpush2.msra.mxu0 0.0
    %1394 = vmatprep.subr.mxu0 0.0
    %1395 = vmatpush2.msra.mxu0 0.0
    %1396 = vmatprep.subr.mxu0 0.0
    %1397 = vmatpush2.msra.mxu0 0.0
    %1398 = vmatprep.subr.mxu0 0.0
    %1399 = vmatpush2.msra.mxu0 0.0
    %1400 = vmatprep.subr.mxu0 0.0
    %1401 = vmatpush2.msra.mxu0 0.0
    %1402 = vmatprep.mubr.f32.mxu0 0.0
    %1403 = vmatmul.mubr.f32.gmra.mxu0 %v1336
    %v1404 = vpop.f32.mrf.mxu0
    %v1405 = vadd.f32 0.0, %v1404
    %v1406 = vpop.f32.mrf.mxu0
    %1407 = vdwg.mxu0
    %1408 = vrot.lane.b32.xlu0 %v170, 64
    %v1409 = vpop.permute.xlu0 %1408
    %v1412 = vsel %vm173, %v875, 0
    %1414 = vmatprep.subr.mxu0 0.0
    %1415 = vmatpush1.msra.mxu0 0.0
    %1416 = vmatprep.subr.mxu0 0.0
    %1417 = vmatpush1.msra.mxu0 0.0
    %1418 = vmatprep.subr.mxu0 0.0
    %1419 = vmatpush1.msra.mxu0 0.0
    %1420 = vmatprep.subr.mxu0 0.0
    %1421 = vmatpush1.msra.mxu0 0.0
    %1422 = vmatprep.subr.mxu0 0.0
    %1423 = vmatpush1.msra.mxu0 0.0
    %1424 = vmatprep.subr.mxu0 0.0
    %1425 = vmatpush1.msra.mxu0 0.0
    %1426 = vmatprep.subr.mxu0 0.0
    %1427 = vmatpush1.msra.mxu0 0.0
    %1428 = vmatprep.subr.mxu0 0.0
    %1429 = vmatpush1.msra.mxu0 0.0
    %1430 = vmatprep.subr.mxu0 0.0
    %1431 = vmatpush1.msra.mxu0 0.0
    %1432 = vmatprep.subr.mxu0 0.0
    %1433 = vmatpush1.msra.mxu0 0.0
    %1434 = vmatprep.subr.mxu0 0.0
    %1435 = vmatpush1.msra.mxu0 0.0
    %1436 = vmatprep.subr.mxu0 0.0
    %1437 = vmatpush1.msra.mxu0 0.0
    %1438 = vmatprep.subr.mxu0 0.0
    %1439 = vmatpush1.msra.mxu0 0.0
    %1440 = vmatprep.subr.mxu0 0.0
    %1441 = vmatpush1.msra.mxu0 0.0
    %1442 = vmatprep.subr.mxu0 0.0
    %1443 = vmatpush1.msra.mxu0 0.0
    %1444 = vmatprep.subr.mxu0 0.0
    %1445 = vmatpush1.msra.mxu0 %v1409
    %1446 = vmatprep.subr.mxu0 0.0
    %1447 = vmatpush2.msra.mxu0 0.0
    %1448 = vmatprep.subr.mxu0 0.0
    %1449 = vmatpush2.msra.mxu0 0.0
    %1450 = vmatprep.subr.mxu0 0.0
    %1451 = vmatpush2.msra.mxu0 0.0
    %1452 = vmatprep.subr.mxu0 0.0
    %1453 = vmatpush2.msra.mxu0 0.0
    %1454 = vmatprep.subr.mxu0 0.0
    %1455 = vmatpush2.msra.mxu0 0.0
    %1456 = vmatprep.subr.mxu0 0.0
    %1457 = vmatpush2.msra.mxu0 0.0
    %1458 = vmatprep.subr.mxu0 0.0
    %1459 = vmatpush2.msra.mxu0 0.0
    %1460 = vmatprep.subr.mxu0 0.0
    %1461 = vmatpush2.msra.mxu0 0.0
    %1462 = vmatprep.subr.mxu0 0.0
    %1463 = vmatpush2.msra.mxu0 0.0
    %1464 = vmatprep.subr.mxu0 0.0
    %1465 = vmatpush2.msra.mxu0 0.0
    %1466 = vmatprep.subr.mxu0 0.0
    %1467 = vmatpush2.msra.mxu0 0.0
    %1468 = vmatprep.subr.mxu0 0.0
    %1469 = vmatpush2.msra.mxu0 0.0
    %1470 = vmatprep.subr.mxu0 0.0
    %1471 = vmatpush2.msra.mxu0 0.0
    %1472 = vmatprep.subr.mxu0 0.0
    %1473 = vmatpush2.msra.mxu0 0.0
    %1474 = vmatprep.subr.mxu0 0.0
    %1475 = vmatpush2.msra.mxu0 0.0
    %1476 = vmatprep.subr.mxu0 0.0
    %1477 = vmatpush2.msra.mxu0 0.0
    %1478 = vmatprep.mubr.f32.mxu0 0.0
    %1479 = vmatmul.mubr.f32.gmra.mxu0 %v1412
    %v1480 = vpop.f32.mrf.mxu0
    %v1481 = vadd.f32 0.0, %v1480
    %v1482 = vpop.f32.mrf.mxu0
    %1483 = vdwg.mxu0
    %1486 = vrot.lane.b32.xlu0 %v1101, 8
    %v1487 = vpop.permute.xlu0 %1486
    %1488 = vrot.lane.b32.xlu0 %v1177, 8
    %v1489 = vpop.permute.xlu0 %1488
    %1494 = vrot.lane.b32.xlu0 %v1253, 16
    %v1495 = vpop.permute.xlu0 %1494
    %1496 = vrot.lane.b32.xlu0 %v1329, 16
    %v1497 = vpop.permute.xlu0 %1496
    %1502 = vrot.lane.b32.xlu0 %v1405, 24
    %v1503 = vpop.permute.xlu0 %1502
    %1504 = vrot.lane.b32.xlu0 %v1481, 24
    %v1505 = vpop.permute.xlu0 %1504
    %v1508 = vsel %vm173, %v949, %v1487
    %v1509 = vsel %vm173, %v1025, %v1489
    %vm1510 = vcmask 130048
    %v1511 = vsel %vm1510, %v1508, %v1495
    %v1512 = vsel %vm1510, %v1509, %v1497
    %vm1513 = vcmask 195584
    %v1514 = vsel %vm1513, %v1511, %v1503
    %v1515 = vsel %vm1513, %v1512, %v1505
    %v1516 = vld [vmem:[#allocation7] sm:$0xff]
    %v1517 = vld [vmem:[#allocation7 + $0x8] sm:$0xff]
    %v1518 = vld [vmem:[#allocation7 + $0x10] sm:$0xff]
    %v1519 = vld [vmem:[#allocation7 + $0x18] sm:$0xff]
    %v1520 = vld [vmem:[%s4] sm:$0x1]
    %v1522 = vlaneseq
    %v1523 = vshrl.u32 %v1522, 7
    %v1524 = vsub.s32 0, %v1523
    %v1525 = vrot.slane %v1520, %v1524
    %v1528 = vsel %vm75, %v1514, 0
    %v1531 = vsel %vm75, %v1515, 0
    %1533 = vmatprep.subr.mxu0 0.0
    %1534 = vmatpush1.msra.mxu0 0.0
    %1535 = vmatprep.subr.mxu0 0.0
    %1536 = vmatpush1.msra.mxu0 0.0
    %1537 = vmatprep.subr.mxu0 0.0
    %1538 = vmatpush1.msra.mxu0 0.0
    %1539 = vmatprep.subr.mxu0 0.0
    %1540 = vmatpush1.msra.mxu0 0.0
    %1541 = vmatprep.subr.mxu0 0.0
    %1542 = vmatpush1.msra.mxu0 0.0
    %1543 = vmatprep.subr.mxu0 0.0
    %1544 = vmatpush1.msra.mxu0 0.0
    %1545 = vmatprep.subr.mxu0 0.0
    %1546 = vmatpush1.msra.mxu0 0.0
    %1547 = vmatprep.subr.mxu0 0.0
    %1548 = vmatpush1.msra.mxu0 0.0
    %1549 = vmatprep.subr.mxu0 0.0
    %1550 = vmatpush1.msra.mxu0 0.0
    %1551 = vmatprep.subr.mxu0 0.0
    %1552 = vmatpush1.msra.mxu0 0.0
    %1553 = vmatprep.subr.mxu0 0.0
    %1554 = vmatpush1.msra.mxu0 0.0
    %1555 = vmatprep.subr.mxu0 0.0
    %1556 = vmatpush1.msra.mxu0 0.0
    %1557 = vmatprep.subr.mxu0 0.0
    %1558 = vmatpush1.msra.mxu0 %v1519
    %1559 = vmatprep.subr.mxu0 0.0
    %1560 = vmatpush1.msra.mxu0 %v1518
    %1561 = vmatprep.subr.mxu0 0.0
    %1562 = vmatpush1.msra.mxu0 %v1517
    %1563 = vmatprep.subr.mxu0 0.0
    %1564 = vmatpush1.msra.mxu0 %v1516
    %1565 = vmatprep.subr.mxu0 0.0
    %1566 = vmatpush2.msra.mxu0 0.0
    %1567 = vmatprep.subr.mxu0 0.0
    %1568 = vmatpush2.msra.mxu0 0.0
    %1569 = vmatprep.subr.mxu0 0.0
    %1570 = vmatpush2.msra.mxu0 0.0
    %1571 = vmatprep.subr.mxu0 0.0
    %1572 = vmatpush2.msra.mxu0 0.0
    %1573 = vmatprep.subr.mxu0 0.0
    %1574 = vmatpush2.msra.mxu0 0.0
    %1575 = vmatprep.subr.mxu0 0.0
    %1576 = vmatpush2.msra.mxu0 0.0
    %1577 = vmatprep.subr.mxu0 0.0
    %1578 = vmatpush2.msra.mxu0 0.0
    %1579 = vmatprep.subr.mxu0 0.0
    %1580 = vmatpush2.msra.mxu0 0.0
    %1581 = vmatprep.subr.mxu0 0.0
    %1582 = vmatpush2.msra.mxu0 0.0
    %1583 = vmatprep.subr.mxu0 0.0
    %1584 = vmatpush2.msra.mxu0 0.0
    %1585 = vmatprep.subr.mxu0 0.0
    %1586 = vmatpush2.msra.mxu0 0.0
    %1587 = vmatprep.subr.mxu0 0.0
    %1588 = vmatpush2.msra.mxu0 0.0
    %1589 = vmatprep.subr.mxu0 0.0
    %1590 = vmatpush2.msra.mxu0 0.0
    %1591 = vmatprep.subr.mxu0 0.0
    %1592 = vmatpush2.msra.mxu0 0.0
    %1593 = vmatprep.subr.mxu0 0.0
    %1594 = vmatpush2.msra.mxu0 0.0
    %1595 = vmatprep.subr.mxu0 0.0
    %1596 = vmatpush2.msra.mxu0 0.0
    %1597 = vmatprep.mubr.f32.mxu0 0.0
    %1598 = vmatmul.mubr.f32.gmra.mxu0 %v1528
    %v1599 = vpop.f32.mrf.mxu0
    %v1600 = vadd.f32 %v1525, %v1599
    %v1601 = vpop.f32.mrf.mxu0
    %1602 = vmatprep.mubr.f32.mxu0 0.0
    %1603 = vmatmul.mubr.f32.gmra.mxu0 %v1531
    %v1604 = vpop.f32.mrf.mxu0
    %v1605 = vadd.f32 %v1525, %v1604
    %v1606 = vpop.f32.mrf.mxu0
    %1607 = vdwg.mxu0
    %v1608 = vmax.f32 %v1600, 0.0
    %v1609 = vmax.f32 %v1605, 0.0
    %vm1610 = vcmask 523264
    %1611 = vst.msk [vmem:[#allocation8] sm:$0xff] %vm1610, %v1608
    %1612 = vst.msk [vmem:[#allocation8 + $0x8] sm:$0xff] %vm1610, %v1609
    // Predicated region
    $region34: #{tpu_custom_call.1} parent=1 // pred_check
      _
    $region35: #{tpu_custom_call.1} parent=1 // pred_check_branch
      %1614 = sbr.rel (0) target = $region37
    $region36: #{tpu_custom_call.1} parent=1 // pred_region
      %s1616 = ssub.s32 256, 256
      %1617 = vsyncadd [#allocation4], %s1616
      %s1618 = sshll.u32 [#allocation8], 4
      %s1619 = int_to_ptr.vmem [resolvable:$true] %s1618
      %1624 = dma.vmem_to_hbm [thread:$0]  %s1619, 256, %s5, [#allocation4], 128, 128, 8
    $region37: #{tpu_custom_call.1} parent=1 // pred_fallthru
      _
    // Predicated region
    $region38: #{tpu_custom_call.1} parent=1 // pred_check
      _
    $region39: #{tpu_custom_call.1} parent=1 // pred_check_branch
      %1626 = sbr.rel (0) target = $region41
    $region40: #{tpu_custom_call.1} parent=1 // pred_region
      %1627 = dma.done [#allocation4], 256
    $region41: #{tpu_custom_call.1} parent=1 // pred_fallthru
      _
    %1628 = vsyncpa [#allocation3], 1
    %1629 = vsyncpa [#allocation6], 1
    %1630 = vsyncpa [#allocation4], 1

</llo_original>
